<compile_context>
chip_gen: v5e
topology: v5e:2x2
jax: 0.10.0
libtpu: 0.0.40
codegen_flags: <defaults>
</compile_context>

<pallas_src>
import functools

import jax
import jax.numpy as jnp
import numpy as np
from jax.experimental import pallas as pl
from jax.experimental.pallas import tpu as pltpu


# ------------------------------------------------------------------ fused Pallas kernel
def sdaconv_kernel(x_ref, mask_ref, w_ref, b_ref, out_ref, *, W, k, o_f):
    n, Lg = x_ref.shape               # (in channels, g * H*W): batch folded into lanes
    kk = k * k
    half = k // 2

    x = x_ref[...]                    # (n, Lg)    f32, NCHW-flat
    mask = mask_ref[...]              # (kk*n, Lg) f32 0/1 zero-padding validity per tap

    # Static lane shifts for the k*k taps.  Lane layout is [img0 | img1 | ...];
    # shifts that cross an image (or H/W) boundary land on lanes the mask zeroes.
    shifts = [(-((ki - half) * W + (kj - half))) % Lg
              for ki in range(k) for kj in range(k)]

    def stacked_taps(inp):
        """Fused im2col: (kk*c, Lg) stacked shifted planes, zero-padded by ONE mask mul."""
        planes = [inp if s == 0 else pltpu.roll(inp, shift=s, axis=1) for s in shifts]
        # Tap-major stacking order: row q*c + ch.  Requires c == n (mask layout).
        return jnp.concatenate(planes, axis=0) * mask          # (kk*c, Lg) f32

    def aconv(inp, wa, ba, wm):
        c = inp.shape[0]
        p = stacked_taps(inp)                                   # (kk*c, Lg) f32
        p_bf = p.astype(jnp.bfloat16)
        # ---- attention conv: ONE MXU matmul with K = kk*c
        logits = jnp.dot(wa, p_bf, preferred_element_type=jnp.float32) + ba   # (kk, Lg)
        # ---- SoftAttn ~ softmax over the k*k attention channels (sublane axis)
        logits = logits - jnp.max(logits, axis=0, keepdims=True)
        e = jnp.exp(logits)
        att = e / jnp.sum(e, axis=0, keepdims=True)             # (kk, Lg) f32, exact div
        # ---- replicate attention per input channel (tap-major order q*c + ch)
        att_full = jnp.concatenate(
            [jnp.broadcast_to(att[q:q + 1, :], (c, Lg)) for q in range(kk)], axis=0)
        mod = (p * att_full).astype(jnp.bfloat16)               # (kk*c, Lg)
        # ---- main conv: ONE MXU matmul with K = kk*c
        return jnp.dot(wm, mod, preferred_element_type=jnp.float32)           # (o_f, Lg)

    # Static slices of the packed weight/bias buffers (single DMA each).
    wa1 = w_ref[0][:kk]               # (kk,  kk*n) bf16
    wm1 = w_ref[1][:o_f]              # (o_f, kk*n) bf16
    wa2 = w_ref[2][:kk]
    wm2 = w_ref[3][:o_f]
    ba1 = b_ref[0]                    # (kk, 1) f32
    ba2 = b_ref[1]

    r1 = jnp.maximum(aconv(x, wa1, ba1, wm1), 0.0)   # conv1 + ReLU (stays in VMEM)
    r2 = aconv(r1, wa2, ba2, wm2)                    # conv2
    out_ref[...] = x + r2                            # residual, lane-dense store


# ------------------------------------------------------------------ host-side helpers
def _tap_weights(w, k):
    """(out, in, k, k) -> (out, k*k*in) with column index q*in + c (tap-major)."""
    o, n = w.shape[0], w.shape[1]
    return jnp.transpose(w, (0, 2, 3, 1)).reshape(o, k * k * n)


def _stacked_masks(H, W, k, n, g):
    """(k*k*n, g*H*W) f32 0/1 masks: conv zero-padding per tap, repeated per channel,
    tiled across the g images folded into the lane axis."""
    L = H * W
    half = k // 2
    l = np.arange(L)
    h, w = l // W, l % W
    m = np.zeros((k * k, L), np.float32)
    for ki in range(k):
        for kj in range(k):
            dh, dw = ki - half, kj - half
            valid = (h + dh >= 0) & (h + dh < H) & (w + dw >= 0) & (w + dw < W)
            m[ki * k + kj] = valid.astype(np.float32)
    m = np.tile(m, (1, g))          # same per-image mask for every folded image
    m = np.repeat(m, n, axis=0)     # row q*n + c -> tap-q mask
    return jnp.asarray(m)


def _default_num_steps(b):
    """1 grid step on single-TC chips (v5e/v6e); 2 parallel steps on v7x (2 TCs)."""
    try:
        kind = jax.devices()[0].device_kind.lower()
    except Exception:
        kind = ""
    if b >= 2 and b % 2 == 0 and ("v7" in kind or "7x" in kind):
        return 2
    return 1


def sdaconv_forward(x, params, k=3, num_steps=None):
    b, n, H, W = x.shape
    L = H * W
    kk = k * k
    o_f = params["w_main2"].shape[0]
    # Residual `x + r2` (from the PyTorch module) requires out channels == in channels.
    assert o_f == n and params["w_main1"].shape[0] == n, "SDAConv residual needs o_f == n"

    if num_steps is None:
        num_steps = _default_num_steps(b)
    assert b % num_steps == 0, "batch must be divisible by num_steps"
    g = b // num_steps
    Lg = g * L

    # x -> (num_steps, n, g*L): the g images of a step are folded along the lane axis.
    x_flat = x.reshape(num_steps, g, n, L).transpose(0, 2, 1, 3).reshape(num_steps, n, Lg)

    mask = _stacked_masks(H, W, k, n, g)                       # (kk*n, Lg) f32

    # Pack all weights into one bf16 buffer (rows padded to a common size) and
    # both attention biases into one f32 buffer -> 4 kernel inputs total.
    rows = max(kk, o_f)
    def pad_rows(w):
        return jnp.pad(w, ((0, rows - w.shape[0]), (0, 0)))
    w_packed = jnp.stack(
        [pad_rows(_tap_weights(params["w_att1"], k)),
         pad_rows(_tap_weights(params["w_main1"], k)),
         pad_rows(_tap_weights(params["w_att2"], k)),
         pad_rows(_tap_weights(params["w_main2"], k))], axis=0).astype(jnp.bfloat16)
    b_packed = jnp.stack([params["b_att1"].reshape(kk, 1),
                          params["b_att2"].reshape(kk, 1)], axis=0).astype(jnp.float32)

    kernel = functools.partial(sdaconv_kernel, W=W, k=k, o_f=o_f)
    out_flat = pl.pallas_call(
        kernel,
        out_shape=jax.ShapeDtypeStruct((num_steps, o_f, Lg), jnp.float32),
        grid=(num_steps,),
        in_specs=[
            pl.BlockSpec((None, n, Lg), lambda i: (i, 0, 0)),          # x (per grid step)
            pl.BlockSpec((kk * n, Lg), lambda i: (0, 0)),              # stacked tap masks
            pl.BlockSpec((4, rows, kk * n), lambda i: (0, 0, 0)),      # packed weights (bf16)
            pl.BlockSpec((2, kk, 1), lambda i: (0, 0, 0)),             # packed att biases
        ],
        out_specs=pl.BlockSpec((None, o_f, Lg), lambda i: (i, 0, 0)),
        compiler_params=pltpu.CompilerParams(
            dimension_semantics=("parallel",)),   # steps shard across TCs on v7x
    )(x_flat, mask, w_packed, b_packed)

    out = out_flat.reshape(num_steps, o_f, g, L).transpose(0, 2, 1, 3)
    return out.reshape(b, o_f, H, W)


# ------------------------------------------------------------------ pure-JAX reference
def unfold_nchw(x, k, pad, stride):
    """F.unfold equivalent. x: (b, c, H, W) -> (b, L, c*k*k), col idx = c*k*k + ki*k + kj."""
    b, c, H, W = x.shape
    n_H = (H + 2 * pad - k) // stride + 1
    n_W = (W + 2 * pad - k) // stride + 1
    xp = jnp.pad(x, ((0, 0), (0, 0), (pad, pad), (pad, pad)))
    cols = []
    for ki in range(k):
        for kj in range(k):
            cols.append(
                xp[:, :, ki : ki + stride * (n_H - 1) + 1 : stride,
                          kj : kj + stride * (n_W - 1) + 1 : stride]
            )
    p = jnp.stack(cols, axis=2)                      # (b, c, k*k, n_H, n_W)
    p = p.reshape(b, c * k * k, n_H * n_W)           # torch unfold layout
    return p.transpose(0, 2, 1)                      # (b, L, C)


def aconv_ref(x, w_att, b_att, w_main, k=3, pad=1, stride=1):
    b, n, H, W = x.shape
    o_f = w_main.shape[0]
    kk = k * k
    att = jax.lax.conv_general_dilated(
        x, w_att, (stride, stride), [(pad, pad), (pad, pad)],
        dimension_numbers=("NCHW", "OIHW", "NCHW"))
    att = att + b_att[None, :, None, None]
    att = jax.nn.softmax(att, axis=1)                                  # (b, kk, H, W)
    patches = unfold_nchw(x, k, pad, stride)                           # (b, L, n*kk)
    att_hw = att.transpose(0, 2, 3, 1).reshape(b, H * W, kk)
    att_full = jnp.tile(att_hw, (1, 1, n))                             # idx c*kk+q -> att[q]
    atx = patches * att_full
    y = atx @ w_main.reshape(o_f, n * kk).T                            # (b, L, o_f)
    return y.reshape(b, H, W, o_f).transpose(0, 3, 1, 2)


def sdaconv_ref(x, params):
    r1 = jnp.maximum(aconv_ref(x, params["w_att1"], params["b_att1"], params["w_main1"]), 0.0)
    r2 = aconv_ref(r1, params["w_att2"], params["b_att2"], params["w_main2"])
    return x + r2


# ------------------------------------------------------------------ main
if __name__ == "__main__":
    b, n, H, W = 2, 4, 16, 16      # out_channels = 4
    k = 3
    kk = k * k

    key = jax.random.PRNGKey(0)
    ks = jax.random.split(key, 7)
    x = jax.random.normal(ks[0], (b, n, H, W), jnp.float32)

    params = dict(
        w_att1=jax.random.normal(ks[1], (kk, n, k, k), jnp.float32) * 0.1,
        b_att1=jax.random.normal(ks[2], (kk,), jnp.float32) * 0.1,
        w_main1=jax.random.normal(ks[3], (n, n, k, k), jnp.float32) * 0.1,
        w_att2=jax.random.normal(ks[4], (kk, n, k, k), jnp.float32) * 0.1,
        b_att2=jax.random.normal(ks[5], (kk,), jnp.float32) * 0.1,
        w_main2=jax.random.normal(ks[6], (n, n, k, k), jnp.float32) * 0.1,
    )

    out = sdaconv_forward(x, params, k=k)
    out = jax.block_until_ready(out)

    ref = sdaconv_ref(x, params)
    assert out.shape == x.shape == ref.shape
    # Tolerance reflects bfloat16 MXU operands (weights + stacked planes) with f32
    # accumulation, per the performance review; the f32 reference is exact.  Any
    # structural bug (wrong tap/mask/weight layout or bad roll wraparound) would
    # produce errors orders of magnitude larger than this.
    np.testing.assert_allclose(np.asarray(out), np.asarray(ref), rtol=2e-2, atol=2e-2)

    print("KERNEL_OK")
</pallas_src>

<mosaic_0001>
module attributes {stable_mosaic.version = 11 : i64} {
  func.func @sdaconv_kernel(%arg0: i32, %arg1: memref<1x4x512xf32, #tpu.memory_space<vmem>>, %arg2: memref<36x512xf32, #tpu.memory_space<vmem>>, %arg3: memref<4x9x36xbf16, #tpu.memory_space<vmem>>, %arg4: memref<2x9x1xf32, #tpu.memory_space<vmem>>, %arg5: memref<1x4x512xf32, #tpu.memory_space<vmem>>) attributes {dimension_semantics = [#tpu.dimension_semantics<parallel>], iteration_bounds = array<i64: 1>, scalar_prefetch = 0 : i64, scratch_operands = 0 : i64, tpu.core_type = #tpu.core_type<tc>, window_params = [{transform_indices = @transform_0, window_bounds = array<i64: 1, 4, 512>}, {pipeline_mode = #tpu.pipeline_mode<synchronous>, transform_indices = @transform_1, window_bounds = array<i64: 36, 512>}, {pipeline_mode = #tpu.pipeline_mode<synchronous>, transform_indices = @transform_2, window_bounds = array<i64: 4, 9, 36>}, {pipeline_mode = #tpu.pipeline_mode<synchronous>, transform_indices = @transform_3, window_bounds = array<i64: 2, 9, 1>}, {transform_indices = @transform_4, window_bounds = array<i64: 1, 4, 512>}]} {
    %c0 = arith.constant 0 : index
    %c0_0 = arith.constant 0 : index
    %c0_1 = arith.constant 0 : index
    %0 = vector.load %arg1[%c0, %c0_0, %c0_1] : memref<1x4x512xf32, #tpu.memory_space<vmem>>, vector<1x4x512xf32>
    %1 = vector.shape_cast %0 : vector<1x4x512xf32> to vector<4x512xf32>
    %c0_2 = arith.constant 0 : index
    %c0_3 = arith.constant 0 : index
    %2 = vector.load %arg2[%c0_2, %c0_3] : memref<36x512xf32, #tpu.memory_space<vmem>>, vector<36x512xf32>
    %c0_4 = arith.constant 0 : index
    %c0_5 = arith.constant 0 : index
    %c0_6 = arith.constant 0 : index
    %3 = vector.load %arg3[%c0_4, %c0_5, %c0_6] : memref<4x9x36xbf16, #tpu.memory_space<vmem>>, vector<1x9x36xbf16>
    %4 = vector.shape_cast %3 : vector<1x9x36xbf16> to vector<9x36xbf16>
    %c1 = arith.constant 1 : index
    %c0_7 = arith.constant 0 : index
    %c0_8 = arith.constant 0 : index
    %5 = vector.load %arg3[%c1, %c0_7, %c0_8] : memref<4x9x36xbf16, #tpu.memory_space<vmem>>, vector<1x9x36xbf16>
    %6 = vector.shape_cast %5 : vector<1x9x36xbf16> to vector<9x36xbf16>
    %7 = vector.extract_strided_slice %6 {offsets = [0, 0], sizes = [4, 36], strides = [1, 1]} : vector<9x36xbf16> to vector<4x36xbf16>
    %c2 = arith.constant 2 : index
    %c0_9 = arith.constant 0 : index
    %c0_10 = arith.constant 0 : index
    %8 = vector.load %arg3[%c2, %c0_9, %c0_10] : memref<4x9x36xbf16, #tpu.memory_space<vmem>>, vector<1x9x36xbf16>
    %9 = vector.shape_cast %8 : vector<1x9x36xbf16> to vector<9x36xbf16>
    %c3 = arith.constant 3 : index
    %c0_11 = arith.constant 0 : index
    %c0_12 = arith.constant 0 : index
    %10 = vector.load %arg3[%c3, %c0_11, %c0_12] : memref<4x9x36xbf16, #tpu.memory_space<vmem>>, vector<1x9x36xbf16>
    %11 = vector.shape_cast %10 : vector<1x9x36xbf16> to vector<9x36xbf16>
    %12 = vector.extract_strided_slice %11 {offsets = [0, 0], sizes = [4, 36], strides = [1, 1]} : vector<9x36xbf16> to vector<4x36xbf16>
    %c0_13 = arith.constant 0 : index
    %c0_14 = arith.constant 0 : index
    %c0_15 = arith.constant 0 : index
    %13 = vector.load %arg4[%c0_13, %c0_14, %c0_15] : memref<2x9x1xf32, #tpu.memory_space<vmem>>, vector<1x9x1xf32>
    %14 = vector.shape_cast %13 : vector<1x9x1xf32> to vector<9x1xf32>
    %c1_16 = arith.constant 1 : index
    %c0_17 = arith.constant 0 : index
    %c0_18 = arith.constant 0 : index
    %15 = vector.load %arg4[%c1_16, %c0_17, %c0_18] : memref<2x9x1xf32, #tpu.memory_space<vmem>>, vector<1x9x1xf32>
    %16 = vector.shape_cast %15 : vector<1x9x1xf32> to vector<9x1xf32>
    %c17_i32 = arith.constant 17 : i32
    %17 = tpu.dynamic_rotate %1 by %c17_i32 dim 1 : vector<4x512xf32>, i32 -> vector<4x512xf32>
    %c16_i32 = arith.constant 16 : i32
    %18 = tpu.dynamic_rotate %1 by %c16_i32 dim 1 : vector<4x512xf32>, i32 -> vector<4x512xf32>
    %c15_i32 = arith.constant 15 : i32
    %19 = tpu.dynamic_rotate %1 by %c15_i32 dim 1 : vector<4x512xf32>, i32 -> vector<4x512xf32>
    %c1_i32 = arith.constant 1 : i32
    %20 = tpu.dynamic_rotate %1 by %c1_i32 dim 1 : vector<4x512xf32>, i32 -> vector<4x512xf32>
    %c511_i32 = arith.constant 511 : i32
    %21 = tpu.dynamic_rotate %1 by %c511_i32 dim 1 : vector<4x512xf32>, i32 -> vector<4x512xf32>
    %c497_i32 = arith.constant 497 : i32
    %22 = tpu.dynamic_rotate %1 by %c497_i32 dim 1 : vector<4x512xf32>, i32 -> vector<4x512xf32>
    %c496_i32 = arith.constant 496 : i32
    %23 = tpu.dynamic_rotate %1 by %c496_i32 dim 1 : vector<4x512xf32>, i32 -> vector<4x512xf32>
    %c495_i32 = arith.constant 495 : i32
    %24 = tpu.dynamic_rotate %1 by %c495_i32 dim 1 : vector<4x512xf32>, i32 -> vector<4x512xf32>
    %25 = tpu.concatenate %17, %18, %19, %20, %1, %21, %22, %23, %24 in 0 : vector<4x512xf32>, vector<4x512xf32>, vector<4x512xf32>, vector<4x512xf32>, vector<4x512xf32>, vector<4x512xf32>, vector<4x512xf32>, vector<4x512xf32>, vector<4x512xf32> -> vector<36x512xf32>
    %26 = arith.mulf %25, %2 : vector<36x512xf32>
    %27 = arith.truncf %26 : vector<36x512xf32> to vector<36x512xbf16>
    %cst = arith.constant dense<0.000000e+00> : vector<9x512xf32>
    %28 = tpu.matmul %4, %27, %cst {dimension_numbers = #tpu.dot_dimension_numbers<[1], [0], [0], [1], [0, 0, 1, 1], [], []>} : vector<9x36xbf16>, vector<36x512xbf16>, vector<9x512xf32> -> vector<9x512xf32>
    %29 = vector.broadcast %14 : vector<9x1xf32> to vector<9x512xf32>
    %30 = arith.addf %28, %29 : vector<9x512xf32>
    %cst_19 = arith.constant dense<0xFF800000> : vector<512xf32>
    %31 = vector.multi_reduction <maximumf>, %30, %cst_19 [0] : vector<9x512xf32> to vector<512xf32>
    %32 = vector.shape_cast %31 : vector<512xf32> to vector<1x512xf32>
    %33 = vector.broadcast %32 : vector<1x512xf32> to vector<9x512xf32>
    %34 = arith.subf %30, %33 : vector<9x512xf32>
    %35 = math.exp %34 : vector<9x512xf32>
    %cst_20 = arith.constant dense<0.000000e+00> : vector<512xf32>
    %36 = vector.multi_reduction <add>, %35, %cst_20 [0] : vector<9x512xf32> to vector<512xf32>
    %37 = vector.shape_cast %36 : vector<512xf32> to vector<1x512xf32>
    %38 = vector.broadcast %37 : vector<1x512xf32> to vector<9x512xf32>
    %39 = arith.divf %35, %38 : vector<9x512xf32>
    %40 = vector.extract_strided_slice %39 {offsets = [0, 0], sizes = [1, 512], strides = [1, 1]} : vector<9x512xf32> to vector<1x512xf32>
    %41 = vector.shape_cast %40 : vector<1x512xf32> to vector<1x512xf32>
    %42 = vector.broadcast %41 : vector<1x512xf32> to vector<4x512xf32>
    %43 = vector.extract_strided_slice %39 {offsets = [1, 0], sizes = [1, 512], strides = [1, 1]} : vector<9x512xf32> to vector<1x512xf32>
    %44 = vector.shape_cast %43 : vector<1x512xf32> to vector<1x512xf32>
    %45 = vector.broadcast %44 : vector<1x512xf32> to vector<4x512xf32>
    %46 = vector.extract_strided_slice %39 {offsets = [2, 0], sizes = [1, 512], strides = [1, 1]} : vector<9x512xf32> to vector<1x512xf32>
    %47 = vector.shape_cast %46 : vector<1x512xf32> to vector<1x512xf32>
    %48 = vector.broadcast %47 : vector<1x512xf32> to vector<4x512xf32>
    %49 = vector.extract_strided_slice %39 {offsets = [3, 0], sizes = [1, 512], strides = [1, 1]} : vector<9x512xf32> to vector<1x512xf32>
    %50 = vector.shape_cast %49 : vector<1x512xf32> to vector<1x512xf32>
    %51 = vector.broadcast %50 : vector<1x512xf32> to vector<4x512xf32>
    %52 = vector.extract_strided_slice %39 {offsets = [4, 0], sizes = [1, 512], strides = [1, 1]} : vector<9x512xf32> to vector<1x512xf32>
    %53 = vector.shape_cast %52 : vector<1x512xf32> to vector<1x512xf32>
    %54 = vector.broadcast %53 : vector<1x512xf32> to vector<4x512xf32>
    %55 = vector.extract_strided_slice %39 {offsets = [5, 0], sizes = [1, 512], strides = [1, 1]} : vector<9x512xf32> to vector<1x512xf32>
    %56 = vector.shape_cast %55 : vector<1x512xf32> to vector<1x512xf32>
    %57 = vector.broadcast %56 : vector<1x512xf32> to vector<4x512xf32>
    %58 = vector.extract_strided_slice %39 {offsets = [6, 0], sizes = [1, 512], strides = [1, 1]} : vector<9x512xf32> to vector<1x512xf32>
    %59 = vector.shape_cast %58 : vector<1x512xf32> to vector<1x512xf32>
    %60 = vector.broadcast %59 : vector<1x512xf32> to vector<4x512xf32>
    %61 = vector.extract_strided_slice %39 {offsets = [7, 0], sizes = [1, 512], strides = [1, 1]} : vector<9x512xf32> to vector<1x512xf32>
    %62 = vector.shape_cast %61 : vector<1x512xf32> to vector<1x512xf32>
    %63 = vector.broadcast %62 : vector<1x512xf32> to vector<4x512xf32>
    %64 = vector.extract_strided_slice %39 {offsets = [8, 0], sizes = [1, 512], strides = [1, 1]} : vector<9x512xf32> to vector<1x512xf32>
    %65 = vector.shape_cast %64 : vector<1x512xf32> to vector<1x512xf32>
    %66 = vector.broadcast %65 : vector<1x512xf32> to vector<4x512xf32>
    %67 = tpu.concatenate %42, %45, %48, %51, %54, %57, %60, %63, %66 in 0 : vector<4x512xf32>, vector<4x512xf32>, vector<4x512xf32>, vector<4x512xf32>, vector<4x512xf32>, vector<4x512xf32>, vector<4x512xf32>, vector<4x512xf32>, vector<4x512xf32> -> vector<36x512xf32>
    %68 = arith.mulf %26, %67 : vector<36x512xf32>
    %69 = arith.truncf %68 : vector<36x512xf32> to vector<36x512xbf16>
    %cst_21 = arith.constant dense<0.000000e+00> : vector<4x512xf32>
    %70 = tpu.matmul %7, %69, %cst_21 {dimension_numbers = #tpu.dot_dimension_numbers<[1], [0], [0], [1], [0, 0, 1, 1], [], []>} : vector<4x36xbf16>, vector<36x512xbf16>, vector<4x512xf32> -> vector<4x512xf32>
    %cst_22 = arith.constant 0.000000e+00 : f32
    %71 = vector.broadcast %cst_22 : f32 to vector<4x512xf32>
    %72 = arith.maximumf %70, %71 : vector<4x512xf32>
    %c17_i32_23 = arith.constant 17 : i32
    %73 = tpu.dynamic_rotate %72 by %c17_i32_23 dim 1 : vector<4x512xf32>, i32 -> vector<4x512xf32>
    %c16_i32_24 = arith.constant 16 : i32
    %74 = tpu.dynamic_rotate %72 by %c16_i32_24 dim 1 : vector<4x512xf32>, i32 -> vector<4x512xf32>
    %c15_i32_25 = arith.constant 15 : i32
    %75 = tpu.dynamic_rotate %72 by %c15_i32_25 dim 1 : vector<4x512xf32>, i32 -> vector<4x512xf32>
    %c1_i32_26 = arith.constant 1 : i32
    %76 = tpu.dynamic_rotate %72 by %c1_i32_26 dim 1 : vector<4x512xf32>, i32 -> vector<4x512xf32>
    %c511_i32_27 = arith.constant 511 : i32
    %77 = tpu.dynamic_rotate %72 by %c511_i32_27 dim 1 : vector<4x512xf32>, i32 -> vector<4x512xf32>
    %c497_i32_28 = arith.constant 497 : i32
    %78 = tpu.dynamic_rotate %72 by %c497_i32_28 dim 1 : vector<4x512xf32>, i32 -> vector<4x512xf32>
    %c496_i32_29 = arith.constant 496 : i32
    %79 = tpu.dynamic_rotate %72 by %c496_i32_29 dim 1 : vector<4x512xf32>, i32 -> vector<4x512xf32>
    %c495_i32_30 = arith.constant 495 : i32
    %80 = tpu.dynamic_rotate %72 by %c495_i32_30 dim 1 : vector<4x512xf32>, i32 -> vector<4x512xf32>
    %81 = tpu.concatenate %73, %74, %75, %76, %72, %77, %78, %79, %80 in 0 : vector<4x512xf32>, vector<4x512xf32>, vector<4x512xf32>, vector<4x512xf32>, vector<4x512xf32>, vector<4x512xf32>, vector<4x512xf32>, vector<4x512xf32>, vector<4x512xf32> -> vector<36x512xf32>
    %82 = arith.mulf %81, %2 : vector<36x512xf32>
    %83 = arith.truncf %82 : vector<36x512xf32> to vector<36x512xbf16>
    %cst_31 = arith.constant dense<0.000000e+00> : vector<9x512xf32>
    %84 = tpu.matmul %9, %83, %cst_31 {dimension_numbers = #tpu.dot_dimension_numbers<[1], [0], [0], [1], [0, 0, 1, 1], [], []>} : vector<9x36xbf16>, vector<36x512xbf16>, vector<9x512xf32> -> vector<9x512xf32>
    %85 = vector.broadcast %16 : vector<9x1xf32> to vector<9x512xf32>
    %86 = arith.addf %84, %85 : vector<9x512xf32>
    %cst_32 = arith.constant dense<0xFF800000> : vector<512xf32>
    %87 = vector.multi_reduction <maximumf>, %86, %cst_32 [0] : vector<9x512xf32> to vector<512xf32>
    %88 = vector.shape_cast %87 : vector<512xf32> to vector<1x512xf32>
    %89 = vector.broadcast %88 : vector<1x512xf32> to vector<9x512xf32>
    %90 = arith.subf %86, %89 : vector<9x512xf32>
    %91 = math.exp %90 : vector<9x512xf32>
    %cst_33 = arith.constant dense<0.000000e+00> : vector<512xf32>
    %92 = vector.multi_reduction <add>, %91, %cst_33 [0] : vector<9x512xf32> to vector<512xf32>
    %93 = vector.shape_cast %92 : vector<512xf32> to vector<1x512xf32>
    %94 = vector.broadcast %93 : vector<1x512xf32> to vector<9x512xf32>
    %95 = arith.divf %91, %94 : vector<9x512xf32>
    %96 = vector.extract_strided_slice %95 {offsets = [0, 0], sizes = [1, 512], strides = [1, 1]} : vector<9x512xf32> to vector<1x512xf32>
    %97 = vector.shape_cast %96 : vector<1x512xf32> to vector<1x512xf32>
    %98 = vector.broadcast %97 : vector<1x512xf32> to vector<4x512xf32>
    %99 = vector.extract_strided_slice %95 {offsets = [1, 0], sizes = [1, 512], strides = [1, 1]} : vector<9x512xf32> to vector<1x512xf32>
    %100 = vector.shape_cast %99 : vector<1x512xf32> to vector<1x512xf32>
    %101 = vector.broadcast %100 : vector<1x512xf32> to vector<4x512xf32>
    %102 = vector.extract_strided_slice %95 {offsets = [2, 0], sizes = [1, 512], strides = [1, 1]} : vector<9x512xf32> to vector<1x512xf32>
    %103 = vector.shape_cast %102 : vector<1x512xf32> to vector<1x512xf32>
    %104 = vector.broadcast %103 : vector<1x512xf32> to vector<4x512xf32>
    %105 = vector.extract_strided_slice %95 {offsets = [3, 0], sizes = [1, 512], strides = [1, 1]} : vector<9x512xf32> to vector<1x512xf32>
    %106 = vector.shape_cast %105 : vector<1x512xf32> to vector<1x512xf32>
    %107 = vector.broadcast %106 : vector<1x512xf32> to vector<4x512xf32>
    %108 = vector.extract_strided_slice %95 {offsets = [4, 0], sizes = [1, 512], strides = [1, 1]} : vector<9x512xf32> to vector<1x512xf32>
    %109 = vector.shape_cast %108 : vector<1x512xf32> to vector<1x512xf32>
    %110 = vector.broadcast %109 : vector<1x512xf32> to vector<4x512xf32>
    %111 = vector.extract_strided_slice %95 {offsets = [5, 0], sizes = [1, 512], strides = [1, 1]} : vector<9x512xf32> to vector<1x512xf32>
    %112 = vector.shape_cast %111 : vector<1x512xf32> to vector<1x512xf32>
    %113 = vector.broadcast %112 : vector<1x512xf32> to vector<4x512xf32>
    %114 = vector.extract_strided_slice %95 {offsets = [6, 0], sizes = [1, 512], strides = [1, 1]} : vector<9x512xf32> to vector<1x512xf32>
    %115 = vector.shape_cast %114 : vector<1x512xf32> to vector<1x512xf32>
    %116 = vector.broadcast %115 : vector<1x512xf32> to vector<4x512xf32>
    %117 = vector.extract_strided_slice %95 {offsets = [7, 0], sizes = [1, 512], strides = [1, 1]} : vector<9x512xf32> to vector<1x512xf32>
    %118 = vector.shape_cast %117 : vector<1x512xf32> to vector<1x512xf32>
    %119 = vector.broadcast %118 : vector<1x512xf32> to vector<4x512xf32>
    %120 = vector.extract_strided_slice %95 {offsets = [8, 0], sizes = [1, 512], strides = [1, 1]} : vector<9x512xf32> to vector<1x512xf32>
    %121 = vector.shape_cast %120 : vector<1x512xf32> to vector<1x512xf32>
    %122 = vector.broadcast %121 : vector<1x512xf32> to vector<4x512xf32>
    %123 = tpu.concatenate %98, %101, %104, %107, %110, %113, %116, %119, %122 in 0 : vector<4x512xf32>, vector<4x512xf32>, vector<4x512xf32>, vector<4x512xf32>, vector<4x512xf32>, vector<4x512xf32>, vector<4x512xf32>, vector<4x512xf32>, vector<4x512xf32> -> vector<36x512xf32>
    %124 = arith.mulf %82, %123 : vector<36x512xf32>
    %125 = arith.truncf %124 : vector<36x512xf32> to vector<36x512xbf16>
    %cst_34 = arith.constant dense<0.000000e+00> : vector<4x512xf32>
    %126 = tpu.matmul %12, %125, %cst_34 {dimension_numbers = #tpu.dot_dimension_numbers<[1], [0], [0], [1], [0, 0, 1, 1], [], []>} : vector<4x36xbf16>, vector<36x512xbf16>, vector<4x512xf32> -> vector<4x512xf32>
    %127 = arith.addf %1, %126 : vector<4x512xf32>
    %c0_35 = arith.constant 0 : index
    %c0_36 = arith.constant 0 : index
    %c0_37 = arith.constant 0 : index
    %128 = vector.load %arg5[%c0_35, %c0_36, %c0_37] : memref<1x4x512xf32, #tpu.memory_space<vmem>>, vector<1x4x512xf32>
    %129 = vector.shape_cast %128 : vector<1x4x512xf32> to vector<4x512xf32>
    %130 = vector.shape_cast %127 : vector<4x512xf32> to vector<1x4x512xf32>
    tpu.vector_store %arg5[%c0_35, %c0_36, %c0_37], %130 {strides = array<i32>} : memref<1x4x512xf32, #tpu.memory_space<vmem>>, vector<1x4x512xf32>,
    return
  }
  func.func @transform_0(%arg0: i32) -> (i32, i32, i32) {
    %c0_i32 = arith.constant 0 : i32
    %c0_i32_0 = arith.constant 0 : i32
    %c0_i32_1 = arith.constant 0 : i32
    return %arg0, %c0_i32, %c0_i32_0 : i32, i32, i32
  }
  func.func @transform_1(%arg0: i32) -> (i32, i32) {
    %c0_i32 = arith.constant 0 : i32
    %c0_i32_0 = arith.constant 0 : i32
    %c0_i32_1 = arith.constant 0 : i32
    return %c0_i32, %c0_i32_0 : i32, i32
  }
  func.func @transform_2(%arg0: i32) -> (i32, i32, i32) {
    %c0_i32 = arith.constant 0 : i32
    %c0_i32_0 = arith.constant 0 : i32
    %c0_i32_1 = arith.constant 0 : i32
    %c0_i32_2 = arith.constant 0 : i32
    return %c0_i32, %c0_i32_0, %c0_i32_1 : i32, i32, i32
  }
  func.func @transform_3(%arg0: i32) -> (i32, i32, i32) {
    %c0_i32 = arith.constant 0 : i32
    %c0_i32_0 = arith.constant 0 : i32
    %c0_i32_1 = arith.constant 0 : i32
    %c0_i32_2 = arith.constant 0 : i32
    return %c0_i32, %c0_i32_0, %c0_i32_1 : i32, i32, i32
  }
  func.func @transform_4(%arg0: i32) -> (i32, i32, i32) {
    %c0_i32 = arith.constant 0 : i32
    %c0_i32_0 = arith.constant 0 : i32
    %c0_i32_1 = arith.constant 0 : i32
    return %arg0, %c0_i32, %c0_i32_0 : i32, i32, i32
  }
}

</mosaic_0001>

<llo_original>
// kernel: tpu_custom_call.1
$region0: #{tpu_custom_call.1}
  #allocation0 [shape = 'u32[]', space=smem, size = 0x4, offset = 0x4, fixed_abs, tag = 'smem constant byte address 0x4 - core index']
  #allocation1 [shape = 'u32[72,128]{1,0:T(1,128)}', space=vmem, size = 0x9000, scoped, tag = 'internal scratch']
  %s0 = inlined_call_operand.vmem [shape: f32[1,4,512], index: 0, kind: input, shape index: {}]
  %s1 = inlined_call_operand.hbm [shape: f32[36,512], index: 1, kind: input, shape index: {}]
  %s2 = inlined_call_operand.vmem [shape: bf16[4,9,36], index: 2, kind: input, shape index: {}]
  %s3 = inlined_call_operand.vmem [shape: f32[2,9,1], index: 3, kind: input, shape index: {}]
  %s4 = inlined_call_operand.hbm [shape: f32[1,4,512], index: 4, kind: output, shape index: {}]
  %s5 = sld [smem:[#allocation0]]
  $region30: #{tpu_custom_call.1} parent=0
    _
  %s7 = ssub.s32 1, %s5
  %s8 = scalar_select 0, %s7, %s5
  $region1: #{tpu_custom_call.1} parent=0
    #allocation2 [shape = 'u8[81920]{0}', space=vmem, size = 0x14000, scoped, tag = 'input window, operand 1, single buffered']
    #allocation3 [shape = 's32[1]{0}', space=sflag, size = 0x4, scoped, tag = 'scoped memory for tpu_custom_call.1']
    #allocation4 [shape = 's32[1]{0}', space=sflag, size = 0x4, scoped, tag = 'scoped memory for tpu_custom_call.1']
    #allocation5 [shape = 'u8[8192]{0}', space=vmem, size = 0x2000, scoped, tag = 'output window, operand 0, single buffered']
    %9 = vsyncpa [#allocation3], 0
    %10 = vsyncpa [#allocation4], 0
    // Predicated region
    $region2: #{tpu_custom_call.1} parent=1 // pred_check
      _
    $region3: #{tpu_custom_call.1} parent=1 // pred_check_branch
      %12 = sbr.rel (0) target = $region5
    $region4: #{tpu_custom_call.1} parent=1 // pred_region
      _
    $region5: #{tpu_custom_call.1} parent=1 // pred_fallthru
      _
    // Predicated region
    $region6: #{tpu_custom_call.1} parent=1 // pred_check
      _
    $region7: #{tpu_custom_call.1} parent=1 // pred_check_branch
      %14 = sbr.rel (0) target = $region9
    $region8: #{tpu_custom_call.1} parent=1 // pred_region
      %16 = vsyncadd [#allocation3], 0
      %s17 = sshll.u32 %s1, 4
      %s18 = int_to_ptr.hbm [resolvable:$true] %s17
      %s19 = sshll.u32 [#allocation2], 4
      %s20 = int_to_ptr.vmem [resolvable:$true] %s19
      %25 = dma.hbm_to_vmem [thread:$0]  %s18, 2560, %s20, [#allocation3], 512, 512, 32
    $region9: #{tpu_custom_call.1} parent=1 // pred_fallthru
      _
    // Predicated region
    $region10: #{tpu_custom_call.1} parent=1 // pred_check
      _
    $region11: #{tpu_custom_call.1} parent=1 // pred_check_branch
      %27 = sbr.rel (0) target = $region13
    $region12: #{tpu_custom_call.1} parent=1 // pred_region
      _
    $region13: #{tpu_custom_call.1} parent=1 // pred_fallthru
      _
    // Predicated region
    $region14: #{tpu_custom_call.1} parent=1 // pred_check
      _
    $region15: #{tpu_custom_call.1} parent=1 // pred_check_branch
      %29 = sbr.rel (0) target = $region17
    $region16: #{tpu_custom_call.1} parent=1 // pred_region
      _
    $region17: #{tpu_custom_call.1} parent=1 // pred_fallthru
      _
    // Predicated region
    $region18: #{tpu_custom_call.1} parent=1 // pred_check
      _
    $region19: #{tpu_custom_call.1} parent=1 // pred_check_branch
      %31 = sbr.rel (0) target = $region21
    $region20: #{tpu_custom_call.1} parent=1 // pred_region
      %33 = dma.done [#allocation3], 2560
    $region21: #{tpu_custom_call.1} parent=1 // pred_fallthru
      _
    %v35 = vld [vmem:[%s0] sm:$0xff]
    %v36 = vld [vmem:[%s0 + $0x8] sm:$0xff]
    %v37 = vld [vmem:[#allocation2] sm:$0xff]
    %v38 = vld [vmem:[#allocation2 + $0x8] sm:$0xff]
    %v39 = vld [vmem:[#allocation2 + $0x10] sm:$0xff]
    %v40 = vld [vmem:[#allocation2 + $0x18] sm:$0xff]
    %v41 = vld [vmem:[#allocation2 + $0x20] sm:$0xff]
    %v42 = vld [vmem:[#allocation2 + $0x28] sm:$0xff]
    %v43 = vld [vmem:[#allocation2 + $0x30] sm:$0xff]
    %v44 = vld [vmem:[#allocation2 + $0x38] sm:$0xff]
    %v45 = vld [vmem:[#allocation2 + $0x40] sm:$0xff]
    %v46 = vld [vmem:[#allocation2 + $0x48] sm:$0xff]
    %v47 = vld [vmem:[#allocation2 + $0x50] sm:$0xff]
    %v48 = vld [vmem:[#allocation2 + $0x58] sm:$0xff]
    %v49 = vld [vmem:[#allocation2 + $0x60] sm:$0xff]
    %v50 = vld [vmem:[#allocation2 + $0x68] sm:$0xff]
    %v51 = vld [vmem:[#allocation2 + $0x70] sm:$0xff]
    %v52 = vld [vmem:[#allocation2 + $0x78] sm:$0xff]
    %v53 = vld [vmem:[#allocation2 + $0x80] sm:$0xf]
    %v54 = vld [vmem:[#allocation2 + $0x88] sm:$0xf]
    %v55 = vld [vmem:[#allocation2 + $0x90] sm:$0xf]
    %v56 = vld [vmem:[#allocation2 + $0x98] sm:$0xf]
    %v57 = vld [vmem:[%s2] sm:$0xf]
    %v58 = vld [vmem:[%s2 + $0x4] sm:$0x1]
    %s59 = scalar_lea.vmem %s2, 8
    %v60 = vld [vmem:[%s59] sm:$0xf]
    %s61 = scalar_lea.vmem %s2, 16
    %v62 = vld [vmem:[%s61] sm:$0xf]
    %v63 = vld [vmem:[%s61 + $0x4] sm:$0x1]
    %s64 = scalar_lea.vmem %s2, 24
    %v65 = vld [vmem:[%s64] sm:$0xf]
    %v66 = vld [vmem:[%s3] sm:$0xff]
    %v67 = vld [vmem:[%s3 + $0x8] sm:$0x1]
    %s68 = scalar_lea.vmem %s3, 16
    %v69 = vld [vmem:[%s68] sm:$0xff]
    %v70 = vld [vmem:[%s68 + $0x8] sm:$0x1]
    %73 = vst [vmem:[#allocation1] ss:$2 sm:$0xff] %v35
    %s74 = scalar_lea.vmem [#allocation1], 16
    %75 = vst [vmem:[%s74] ss:$2 sm:$0xff] %v36
    %v76 = vld.sshfl [vmem:[#allocation1] sm:$0xff pattern:$0x75316420]
    %v77 = vld.sshfl [vmem:[#allocation1 + $0x8] sm:$0xff pattern:$0x75316420]
    %v78 = vld.sshfl [vmem:[#allocation1 + $0x10] sm:$0xff pattern:$0x75316420]
    %v79 = vld.sshfl [vmem:[#allocation1 + $0x18] sm:$0xff pattern:$0x75316420]
    %84 = vrot.lane.b32.xlu0 %v76, 17
    %v85 = vpop.permute.xlu0 %84
    %86 = vrot.lane.b32.xlu0 %v77, 17
    %v87 = vpop.permute.xlu0 %86
    %88 = vrot.lane.b32.xlu0 %v78, 17
    %v89 = vpop.permute.xlu0 %88
    %90 = vrot.lane.b32.xlu0 %v79, 17
    %v91 = vpop.permute.xlu0 %90
    %v92 = vlaneseq
    %v93 = vand.u32 %v92, 127
    %vm94 = vcmp.lt.s32.totalorder %v93, 17
    %v95 = vsel %vm94, %v89, %v91
    %v96 = vsel %vm94, %v87, %v89
    %v97 = vsel %vm94, %v85, %v87
    %v98 = vsel %vm94, %v91, %v85
    %99 = vst [vmem:[#allocation1] ss:$2 sm:$0xff] %v35
    %s100 = scalar_lea.vmem [#allocation1], 16
    %101 = vst [vmem:[%s100] ss:$2 sm:$0xff] %v36
    %v102 = vld.sshfl [vmem:[#allocation1] sm:$0xff pattern:$0x75316420]
    %v103 = vld.sshfl [vmem:[#allocation1 + $0x8] sm:$0xff pattern:$0x75316420]
    %v104 = vld.sshfl [vmem:[#allocation1 + $0x10] sm:$0xff pattern:$0x75316420]
    %v105 = vld.sshfl [vmem:[#allocation1 + $0x18] sm:$0xff pattern:$0x75316420]
    %110 = vrot.lane.b32.xlu0 %v102, 16
    %v111 = vpop.permute.xlu0 %110
    %112 = vrot.lane.b32.xlu0 %v103, 16
    %v113 = vpop.permute.xlu0 %112
    %114 = vrot.lane.b32.xlu0 %v104, 16
    %v115 = vpop.permute.xlu0 %114
    %116 = vrot.lane.b32.xlu0 %v105, 16
    %v117 = vpop.permute.xlu0 %116
    %vm118 = vcmp.lt.s32.totalorder %v93, 16
    %v119 = vsel %vm118, %v115, %v117
    %v120 = vsel %vm118, %v113, %v115
    %v121 = vsel %vm118, %v111, %v113
    %v122 = vsel %vm118, %v117, %v111
    %123 = vst [vmem:[#allocation1] ss:$2 sm:$0xff] %v35
    %s124 = scalar_lea.vmem [#allocation1], 16
    %125 = vst [vmem:[%s124] ss:$2 sm:$0xff] %v36
    %v126 = vld.sshfl [vmem:[#allocation1] sm:$0xff pattern:$0x75316420]
    %v127 = vld.sshfl [vmem:[#allocation1 + $0x8] sm:$0xff pattern:$0x75316420]
    %v128 = vld.sshfl [vmem:[#allocation1 + $0x10] sm:$0xff pattern:$0x75316420]
    %v129 = vld.sshfl [vmem:[#allocation1 + $0x18] sm:$0xff pattern:$0x75316420]
    %134 = vrot.lane.b32.xlu0 %v126, 15
    %v135 = vpop.permute.xlu0 %134
    %136 = vrot.lane.b32.xlu0 %v127, 15
    %v137 = vpop.permute.xlu0 %136
    %138 = vrot.lane.b32.xlu0 %v128, 15
    %v139 = vpop.permute.xlu0 %138
    %140 = vrot.lane.b32.xlu0 %v129, 15
    %v141 = vpop.permute.xlu0 %140
    %vm142 = vcmp.lt.s32.totalorder %v93, 15
    %v143 = vsel %vm142, %v139, %v141
    %v144 = vsel %vm142, %v137, %v139
    %v145 = vsel %vm142, %v135, %v137
    %v146 = vsel %vm142, %v141, %v135
    %147 = vst [vmem:[#allocation1] ss:$2 sm:$0xff] %v35
    %s148 = scalar_lea.vmem [#allocation1], 16
    %149 = vst [vmem:[%s148] ss:$2 sm:$0xff] %v36
    %v150 = vld.sshfl [vmem:[#allocation1] sm:$0xff pattern:$0x75316420]
    %v151 = vld.sshfl [vmem:[#allocation1 + $0x8] sm:$0xff pattern:$0x75316420]
    %v152 = vld.sshfl [vmem:[#allocation1 + $0x10] sm:$0xff pattern:$0x75316420]
    %v153 = vld.sshfl [vmem:[#allocation1 + $0x18] sm:$0xff pattern:$0x75316420]
    %158 = vrot.lane.b32.xlu0 %v150, 1
    %v159 = vpop.permute.xlu0 %158
    %160 = vrot.lane.b32.xlu0 %v151, 1
    %v161 = vpop.permute.xlu0 %160
    %162 = vrot.lane.b32.xlu0 %v152, 1
    %v163 = vpop.permute.xlu0 %162
    %164 = vrot.lane.b32.xlu0 %v153, 1
    %v165 = vpop.permute.xlu0 %164
    %vm166 = vcmp.lt.s32.totalorder %v93, 1
    %v167 = vsel %vm166, %v163, %v165
    %v168 = vsel %vm166, %v161, %v163
    %v169 = vsel %vm166, %v159, %v161
    %v170 = vsel %vm166, %v165, %v159
    %171 = vst [vmem:[#allocation1] ss:$2 sm:$0xff] %v35
    %s172 = scalar_lea.vmem [#allocation1], 16
    %173 = vst [vmem:[%s172] ss:$2 sm:$0xff] %v36
    %v174 = vld.sshfl [vmem:[#allocation1] sm:$0xff pattern:$0x75316420]
    %v175 = vld.sshfl [vmem:[#allocation1 + $0x8] sm:$0xff pattern:$0x75316420]
    %v176 = vld.sshfl [vmem:[#allocation1 + $0x10] sm:$0xff pattern:$0x75316420]
    %v177 = vld.sshfl [vmem:[#allocation1 + $0x18] sm:$0xff pattern:$0x75316420]
    %182 = vrot.lane.b32.xlu0 %v174, 127
    %v183 = vpop.permute.xlu0 %182
    %184 = vrot.lane.b32.xlu0 %v175, 127
    %v185 = vpop.permute.xlu0 %184
    %186 = vrot.lane.b32.xlu0 %v176, 127
    %v187 = vpop.permute.xlu0 %186
    %188 = vrot.lane.b32.xlu0 %v177, 127
    %v189 = vpop.permute.xlu0 %188
    %vm190 = vcmp.lt.s32.totalorder %v93, 127
    %v191 = vsel %vm190, %v187, %v189
    %v192 = vsel %vm190, %v185, %v187
    %v193 = vsel %vm190, %v183, %v185
    %v194 = vsel %vm190, %v189, %v183
    %195 = vst [vmem:[#allocation1] ss:$2 sm:$0xff] %v35
    %s196 = scalar_lea.vmem [#allocation1], 16
    %197 = vst [vmem:[%s196] ss:$2 sm:$0xff] %v36
    %v198 = vld.sshfl [vmem:[#allocation1] sm:$0xff pattern:$0x75316420]
    %v199 = vld.sshfl [vmem:[#allocation1 + $0x8] sm:$0xff pattern:$0x75316420]
    %v200 = vld.sshfl [vmem:[#allocation1 + $0x10] sm:$0xff pattern:$0x75316420]
    %v201 = vld.sshfl [vmem:[#allocation1 + $0x18] sm:$0xff pattern:$0x75316420]
    %206 = vrot.lane.b32.xlu0 %v198, 113
    %v207 = vpop.permute.xlu0 %206
    %208 = vrot.lane.b32.xlu0 %v199, 113
    %v209 = vpop.permute.xlu0 %208
    %210 = vrot.lane.b32.xlu0 %v200, 113
    %v211 = vpop.permute.xlu0 %210
    %212 = vrot.lane.b32.xlu0 %v201, 113
    %v213 = vpop.permute.xlu0 %212
    %vm214 = vcmp.lt.s32.totalorder %v93, 113
    %v215 = vsel %vm214, %v211, %v213
    %v216 = vsel %vm214, %v209, %v211
    %v217 = vsel %vm214, %v207, %v209
    %v218 = vsel %vm214, %v213, %v207
    %219 = vst [vmem:[#allocation1] ss:$2 sm:$0xff] %v35
    %s220 = scalar_lea.vmem [#allocation1], 16
    %221 = vst [vmem:[%s220] ss:$2 sm:$0xff] %v36
    %v222 = vld.sshfl [vmem:[#allocation1] sm:$0xff pattern:$0x75316420]
    %v223 = vld.sshfl [vmem:[#allocation1 + $0x8] sm:$0xff pattern:$0x75316420]
    %v224 = vld.sshfl [vmem:[#allocation1 + $0x10] sm:$0xff pattern:$0x75316420]
    %v225 = vld.sshfl [vmem:[#allocation1 + $0x18] sm:$0xff pattern:$0x75316420]
    %230 = vrot.lane.b32.xlu0 %v222, 112
    %v231 = vpop.permute.xlu0 %230
    %232 = vrot.lane.b32.xlu0 %v223, 112
    %v233 = vpop.permute.xlu0 %232
    %234 = vrot.lane.b32.xlu0 %v224, 112
    %v235 = vpop.permute.xlu0 %234
    %236 = vrot.lane.b32.xlu0 %v225, 112
    %v237 = vpop.permute.xlu0 %236
    %vm238 = vcmp.lt.s32.totalorder %v93, 112
    %v239 = vsel %vm238, %v235, %v237
    %v240 = vsel %vm238, %v233, %v235
    %v241 = vsel %vm238, %v231, %v233
    %v242 = vsel %vm238, %v237, %v231
    %243 = vst [vmem:[#allocation1] ss:$2 sm:$0xff] %v35
    %s244 = scalar_lea.vmem [#allocation1], 16
    %245 = vst [vmem:[%s244] ss:$2 sm:$0xff] %v36
    %v246 = vld.sshfl [vmem:[#allocation1] sm:$0xff pattern:$0x75316420]
    %v247 = vld.sshfl [vmem:[#allocation1 + $0x8] sm:$0xff pattern:$0x75316420]
    %v248 = vld.sshfl [vmem:[#allocation1 + $0x10] sm:$0xff pattern:$0x75316420]
    %v249 = vld.sshfl [vmem:[#allocation1 + $0x18] sm:$0xff pattern:$0x75316420]
    %254 = vrot.lane.b32.xlu0 %v246, 111
    %v255 = vpop.permute.xlu0 %254
    %256 = vrot.lane.b32.xlu0 %v247, 111
    %v257 = vpop.permute.xlu0 %256
    %258 = vrot.lane.b32.xlu0 %v248, 111
    %v259 = vpop.permute.xlu0 %258
    %260 = vrot.lane.b32.xlu0 %v249, 111
    %v261 = vpop.permute.xlu0 %260
    %vm262 = vcmp.lt.s32.totalorder %v93, 111
    %v263 = vsel %vm262, %v259, %v261
    %v264 = vsel %vm262, %v257, %v259
    %v265 = vsel %vm262, %v255, %v257
    %v266 = vsel %vm262, %v261, %v255
    %v271 = vrot.slane %v122, 4
    %v272 = vrot.slane %v121, 4
    %v273 = vrot.slane %v120, 4
    %v274 = vrot.slane %v119, 4
    %v283 = vrot.slane %v170, 4
    %v284 = vrot.slane %v169, 4
    %v285 = vrot.slane %v168, 4
    %v286 = vrot.slane %v167, 4
    %291 = vst [vmem:[#allocation1] ss:$2 sm:$0xff] %v35
    %s292 = scalar_lea.vmem [#allocation1], 16
    %293 = vst [vmem:[%s292] ss:$2 sm:$0xff] %v36
    %v294 = vld.sshfl [vmem:[#allocation1] sm:$0xff pattern:$0x75316420]
    %v295 = vld.sshfl [vmem:[#allocation1 + $0x8] sm:$0xff pattern:$0x75316420]
    %v296 = vld.sshfl [vmem:[#allocation1 + $0x10] sm:$0xff pattern:$0x75316420]
    %v297 = vld.sshfl [vmem:[#allocation1 + $0x18] sm:$0xff pattern:$0x75316420]
    %v306 = vrot.slane %v193, 4
    %v307 = vrot.slane %v192, 4
    %v308 = vrot.slane %v191, 4
    %v309 = vrot.slane %v194, 4
    %v318 = vrot.slane %v241, 4
    %v319 = vrot.slane %v240, 4
    %v320 = vrot.slane %v239, 4
    %v321 = vrot.slane %v242, 4
    %vm326 = vcmask 1043456
    %v327 = vsel %vm326, %v98, %v271
    %v328 = vsel %vm326, %v97, %v272
    %v329 = vsel %vm326, %v96, %v273
    %v330 = vsel %vm326, %v95, %v274
    %v331 = vsel %vm326, %v146, %v283
    %v332 = vsel %vm326, %v145, %v284
    %v333 = vsel %vm326, %v144, %v285
    %v334 = vsel %vm326, %v143, %v286
    %v335 = vsel %vm326, %v294, %v306
    %v336 = vsel %vm326, %v295, %v307
    %v337 = vsel %vm326, %v296, %v308
    %v338 = vsel %vm326, %v297, %v309
    %v339 = vsel %vm326, %v217, %v318
    %v340 = vsel %vm326, %v216, %v319
    %v341 = vsel %vm326, %v215, %v320
    %v342 = vsel %vm326, %v218, %v321
    %v343 = vmul.f32 %v327, %v37
    %v344 = vmul.f32 %v328, %v38
    %v345 = vmul.f32 %v329, %v39
    %v346 = vmul.f32 %v330, %v40
    %v347 = vmul.f32 %v331, %v41
    %v348 = vmul.f32 %v332, %v42
    %v349 = vmul.f32 %v333, %v43
    %v350 = vmul.f32 %v334, %v44
    %v351 = vmul.f32 %v335, %v45
    %v352 = vmul.f32 %v336, %v46
    %v353 = vmul.f32 %v337, %v47
    %v354 = vmul.f32 %v338, %v48
    %v355 = vmul.f32 %v339, %v49
    %v356 = vmul.f32 %v340, %v50
    %v357 = vmul.f32 %v341, %v51
    %v358 = vmul.f32 %v342, %v52
    %v359 = vmul.f32 %v265, %v53
    %v360 = vmul.f32 %v264, %v54
    %v361 = vmul.f32 %v263, %v55
    %v362 = vmul.f32 %v266, %v56
    %v363 = vpack.c.bf16 %v347, %v343
    %v364 = vpack.c.bf16 %v348, %v344
    %v365 = vpack.c.bf16 %v349, %v345
    %v366 = vpack.c.bf16 %v350, %v346
    %v367 = vpack.c.bf16 %v355, %v351
    %v368 = vpack.c.bf16 %v356, %v352
    %v369 = vpack.c.bf16 %v357, %v353
    %v370 = vpack.c.bf16 %v358, %v354
    %v371 = vpack.c.bf16 %v359, %v359
    %v372 = vpack.c.bf16 %v360, %v360
    %v373 = vpack.c.bf16 %v361, %v361
    %v374 = vpack.c.bf16 %v362, %v362
    %376 = vset.pattern.permute.xlu0 0
    %377 = vperm.xlu0 %376, %v66
    %v378 = vpop.permute.xlu0 %377
    %381 = vset.pattern.permute.xlu0 0
    %382 = vperm.xlu0 %381, %v67
    %v383 = vpop.permute.xlu0 %382
    %v387 = vunpack.c.l.b16 %v57
    %v388 = vunpack.c.l.b16 %v58
    %v389 = vpack.c.b16 %v388, %v387
    %vm390 = vcmask 293888
    %v392 = vsel %vm390, %v389, 0
    %vm394 = vcmask 1041408
    %v396 = vsel %vm394, %v371, 0
    %v399 = vsel %vm394, %v372, 0
    %v402 = vsel %vm394, %v373, 0
    %v405 = vsel %vm394, %v374, 0
    %407 = vmatpush.bf16.msra.mxu0 0
    %408 = vmatpush.bf16.msra.mxu0 0
    %409 = vmatpush.bf16.msra.mxu0 0
    %410 = vmatpush.bf16.msra.mxu0 0
    %411 = vmatpush.bf16.msra.mxu0 0
    %412 = vmatpush.bf16.msra.mxu0 %v396
    %413 = vmatpush.bf16.msra.mxu0 %v367
    %414 = vmatpush.bf16.msra.mxu0 %v363
    %415 = vmatmul.bf16.gmra.mxu0 %v392
    %v416 = vpop.f32.mrf.mxu0
    %v417 = vadd.f32 %v378, %v416
    %v418 = vpop.f32.mrf.mxu0
    %v419 = vadd.f32 %v383, %v418
    %420 = vdwg.mxu0
    %421 = vmatpush.bf16.msra.mxu0 0
    %422 = vmatpush.bf16.msra.mxu0 0
    %423 = vmatpush.bf16.msra.mxu0 0
    %424 = vmatpush.bf16.msra.mxu0 0
    %425 = vmatpush.bf16.msra.mxu0 0
    %426 = vmatpush.bf16.msra.mxu0 %v399
    %427 = vmatpush.bf16.msra.mxu0 %v368
    %428 = vmatpush.bf16.msra.mxu0 %v364
    %429 = vmatmul.bf16.gmra.mxu0 %v392
    %v430 = vpop.f32.mrf.mxu0
    %v431 = vadd.f32 %v378, %v430
    %v432 = vpop.f32.mrf.mxu0
    %v433 = vadd.f32 %v383, %v432
    %434 = vdwg.mxu0
    %435 = vmatpush.bf16.msra.mxu0 0
    %436 = vmatpush.bf16.msra.mxu0 0
    %437 = vmatpush.bf16.msra.mxu0 0
    %438 = vmatpush.bf16.msra.mxu0 0
    %439 = vmatpush.bf16.msra.mxu0 0
    %440 = vmatpush.bf16.msra.mxu0 %v402
    %441 = vmatpush.bf16.msra.mxu0 %v369
    %442 = vmatpush.bf16.msra.mxu0 %v365
    %443 = vmatmul.bf16.gmra.mxu0 %v392
    %v444 = vpop.f32.mrf.mxu0
    %v445 = vadd.f32 %v378, %v444
    %v446 = vpop.f32.mrf.mxu0
    %v447 = vadd.f32 %v383, %v446
    %448 = vdwg.mxu0
    %449 = vmatpush.bf16.msra.mxu0 0
    %450 = vmatpush.bf16.msra.mxu0 0
    %451 = vmatpush.bf16.msra.mxu0 0
    %452 = vmatpush.bf16.msra.mxu0 0
    %453 = vmatpush.bf16.msra.mxu0 0
    %454 = vmatpush.bf16.msra.mxu0 %v405
    %455 = vmatpush.bf16.msra.mxu0 %v370
    %456 = vmatpush.bf16.msra.mxu0 %v366
    %457 = vmatmul.bf16.gmra.mxu0 %v392
    %v458 = vpop.f32.mrf.mxu0
    %v459 = vadd.f32 %v378, %v458
    %v460 = vpop.f32.mrf.mxu0
    %v461 = vadd.f32 %v383, %v460
    %462 = vdwg.mxu0
    %vm463 = vcmask 1040384
    %v464 = vsel %vm463, %v419, -inf
    %v465 = vmax.f32 %v417, %v464
    %v466 = vrot.slane %v465, 4
    %v467 = vmax.f32 %v465, %v466
    %v468 = vrot.slane %v467, 2
    %v469 = vmax.f32 %v467, %v468
    %v470 = vrot.slane %v469, 1
    %v471 = vmax.f32 %v469, %v470
    %v472 = vsel %vm463, %v433, -inf
    %v473 = vmax.f32 %v431, %v472
    %v474 = vrot.slane %v473, 4
    %v475 = vmax.f32 %v473, %v474
    %v476 = vrot.slane %v475, 2
    %v477 = vmax.f32 %v475, %v476
    %v478 = vrot.slane %v477, 1
    %v479 = vmax.f32 %v477, %v478
    %v480 = vsel %vm463, %v447, -inf
    %v481 = vmax.f32 %v445, %v480
    %v482 = vrot.slane %v481, 4
    %v483 = vmax.f32 %v481, %v482
    %v484 = vrot.slane %v483, 2
    %v485 = vmax.f32 %v483, %v484
    %v486 = vrot.slane %v485, 1
    %v487 = vmax.f32 %v485, %v486
    %v488 = vsel %vm463, %v461, -inf
    %v489 = vmax.f32 %v459, %v488
    %v490 = vrot.slane %v489, 4
    %v491 = vmax.f32 %v489, %v490
    %v492 = vrot.slane %v491, 2
    %v493 = vmax.f32 %v491, %v492
    %v494 = vrot.slane %v493, 1
    %v495 = vmax.f32 %v493, %v494
    %v496 = vsub.f32 %v417, %v471
    %v497 = vsub.f32 %v431, %v479
    %v498 = vsub.f32 %v445, %v487
    %v499 = vsub.f32 %v459, %v495
    %v500 = vsub.f32 %v419, %v471
    %v501 = vsub.f32 %v433, %v479
    %v502 = vsub.f32 %v447, %v487
    %v503 = vsub.f32 %v461, %v495
    %v504 = vmul.f32 %v496, 1.442695
    %v505 = vpow.pop %v504
    %v506 = vmul.f32 %v497, 1.442695
    %v507 = vpow.pop %v506
    %v508 = vmul.f32 %v498, 1.442695
    %v509 = vpow.pop %v508
    %v510 = vmul.f32 %v499, 1.442695
    %v511 = vpow.pop %v510
    %v512 = vmul.f32 %v500, 1.442695
    %v513 = vpow.pop %v512
    %v514 = vmul.f32 %v501, 1.442695
    %v515 = vpow.pop %v514
    %v516 = vmul.f32 %v502, 1.442695
    %v517 = vpow.pop %v516
    %v518 = vmul.f32 %v503, 1.442695
    %v519 = vpow.pop %v518
    %v520 = vsel %vm463, %v513, 0.0
    %v521 = vadd.f32 %v505, %v520
    %v522 = vrot.slane %v521, 4
    %v523 = vadd.f32 %v521, %v522
    %v524 = vrot.slane %v523, 2
    %v525 = vadd.f32 %v523, %v524
    %v526 = vrot.slane %v525, 1
    %v527 = vadd.f32 %v525, %v526
    %v528 = vsel %vm463, %v515, 0.0
    %v529 = vadd.f32 %v507, %v528
    %v530 = vrot.slane %v529, 4
    %v531 = vadd.f32 %v529, %v530
    %v532 = vrot.slane %v531, 2
    %v533 = vadd.f32 %v531, %v532
    %v534 = vrot.slane %v533, 1
    %v535 = vadd.f32 %v533, %v534
    %v536 = vsel %vm463, %v517, 0.0
    %v537 = vadd.f32 %v509, %v536
    %v538 = vrot.slane %v537, 4
    %v539 = vadd.f32 %v537, %v538
    %v540 = vrot.slane %v539, 2
    %v541 = vadd.f32 %v539, %v540
    %v542 = vrot.slane %v541, 1
    %v543 = vadd.f32 %v541, %v542
    %v544 = vsel %vm463, %v519, 0.0
    %v545 = vadd.f32 %v511, %v544
    %v546 = vrot.slane %v545, 4
    %v547 = vadd.f32 %v545, %v546
    %v548 = vrot.slane %v547, 2
    %v549 = vadd.f32 %v547, %v548
    %v550 = vrot.slane %v549, 1
    %v551 = vadd.f32 %v549, %v550
    %v552 = vrcp.pop %v527
    %v553 = vmul.f32 %v527, %v552
    %v554 = vsub.f32 1.0, %v553
    %v555 = vmul.f32 %v552, %v554
    %v556 = vadd.f32 %v552, %v555
    %vm557 = vweird.f32 %v527
    %vm558 = vweird.f32 %v552
    %vm559 = vmor %vm557, %vm558
    %v560 = vsel %vm559, %v552, %v556
    %v561 = vand.u32 2147483647, %v527
    %vm562 = vcmp.eq.f32.partialorder %v561, 8.507059e+37
    %v563 = vand.u32 %v527, 2147483648
    %v564 = vor.u32 1.1754944e-38, %v563
    %v565 = vsel %vm562, %v564, %v560
    %v566 = vmul.f32 %v505, %v565
    %v567 = vrcp.pop %v535
    %v568 = vmul.f32 %v535, %v567
    %v569 = vsub.f32 1.0, %v568
    %v570 = vmul.f32 %v567, %v569
    %v571 = vadd.f32 %v567, %v570
    %vm572 = vweird.f32 %v535
    %vm573 = vweird.f32 %v567
    %vm574 = vmor %vm572, %vm573
    %v575 = vsel %vm574, %v567, %v571
    %v576 = vand.u32 2147483647, %v535
    %vm577 = vcmp.eq.f32.partialorder %v576, 8.507059e+37
    %v578 = vand.u32 %v535, 2147483648
    %v579 = vor.u32 1.1754944e-38, %v578
    %v580 = vsel %vm577, %v579, %v575
    %v581 = vmul.f32 %v507, %v580
    %v582 = vrcp.pop %v543
    %v583 = vmul.f32 %v543, %v582
    %v584 = vsub.f32 1.0, %v583
    %v585 = vmul.f32 %v582, %v584
    %v586 = vadd.f32 %v582, %v585
    %vm587 = vweird.f32 %v543
    %vm588 = vweird.f32 %v582
    %vm589 = vmor %vm587, %vm588
    %v590 = vsel %vm589, %v582, %v586
    %v591 = vand.u32 2147483647, %v543
    %vm592 = vcmp.eq.f32.partialorder %v591, 8.507059e+37
    %v593 = vand.u32 %v543, 2147483648
    %v594 = vor.u32 1.1754944e-38, %v593
    %v595 = vsel %vm592, %v594, %v590
    %v596 = vmul.f32 %v509, %v595
    %v597 = vrcp.pop %v551
    %v598 = vmul.f32 %v551, %v597
    %v599 = vsub.f32 1.0, %v598
    %v600 = vmul.f32 %v597, %v599
    %v601 = vadd.f32 %v597, %v600
    %vm602 = vweird.f32 %v551
    %vm603 = vweird.f32 %v597
    %vm604 = vmor %vm602, %vm603
    %v605 = vsel %vm604, %v597, %v601
    %v606 = vand.u32 2147483647, %v551
    %vm607 = vcmp.eq.f32.partialorder %v606, 8.507059e+37
    %v608 = vand.u32 %v551, 2147483648
    %v609 = vor.u32 1.1754944e-38, %v608
    %v610 = vsel %vm607, %v609, %v605
    %v611 = vmul.f32 %v511, %v610
    %v612 = vmul.f32 %v513, %v565
    %v613 = vmul.f32 %v515, %v580
    %v614 = vmul.f32 %v517, %v595
    %v615 = vmul.f32 %v519, %v610
    %v616 = vperm.slane %v566, 0
    %v617 = vperm.slane %v581, 0
    %v618 = vperm.slane %v596, 0
    %v619 = vperm.slane %v611, 0
    %v620 = vperm.slane %v566, 1
    %v621 = vperm.slane %v581, 1
    %v622 = vperm.slane %v596, 1
    %v623 = vperm.slane %v611, 1
    %v624 = vperm.slane %v566, 2
    %v625 = vperm.slane %v581, 2
    %v626 = vperm.slane %v596, 2
    %v627 = vperm.slane %v611, 2
    %v628 = vperm.slane %v566, 3
    %v629 = vperm.slane %v581, 3
    %v630 = vperm.slane %v596, 3
    %v631 = vperm.slane %v611, 3
    %v632 = vperm.slane %v566, 4
    %v633 = vperm.slane %v581, 4
    %v634 = vperm.slane %v596, 4
    %v635 = vperm.slane %v611, 4
    %v636 = vperm.slane %v566, 5
    %v637 = vperm.slane %v581, 5
    %v638 = vperm.slane %v596, 5
    %v639 = vperm.slane %v611, 5
    %v640 = vperm.slane %v566, 6
    %v641 = vperm.slane %v581, 6
    %v642 = vperm.slane %v596, 6
    %v643 = vperm.slane %v611, 6
    %v644 = vperm.slane %v566, 7
    %v645 = vperm.slane %v581, 7
    %v646 = vperm.slane %v596, 7
    %v647 = vperm.slane %v611, 7
    %v648 = vperm.slane %v612, 0
    %v649 = vperm.slane %v613, 0
    %v650 = vperm.slane %v614, 0
    %v651 = vperm.slane %v615, 0
    %v652 = vsel %vm326, %v616, %v620
    %v653 = vsel %vm326, %v617, %v621
    %v654 = vsel %vm326, %v618, %v622
    %v655 = vsel %vm326, %v619, %v623
    %v656 = vsel %vm326, %v624, %v628
    %v657 = vsel %vm326, %v625, %v629
    %v658 = vsel %vm326, %v626, %v630
    %v659 = vsel %vm326, %v627, %v631
    %v660 = vsel %vm326, %v632, %v636
    %v661 = vsel %vm326, %v633, %v637
    %v662 = vsel %vm326, %v634, %v638
    %v663 = vsel %vm326, %v635, %v639
    %v664 = vsel %vm326, %v640, %v644
    %v665 = vsel %vm326, %v641, %v645
    %v666 = vsel %vm326, %v642, %v646
    %v667 = vsel %vm326, %v643, %v647
    %v668 = vmul.f32 %v343, %v652
    %v669 = vmul.f32 %v344, %v653
    %v670 = vmul.f32 %v345, %v654
    %v671 = vmul.f32 %v346, %v655
    %v672 = vmul.f32 %v347, %v656
    %v673 = vmul.f32 %v348, %v657
    %v674 = vmul.f32 %v349, %v658
    %v675 = vmul.f32 %v350, %v659
    %v676 = vmul.f32 %v351, %v660
    %v677 = vmul.f32 %v352, %v661
    %v678 = vmul.f32 %v353, %v662
    %v679 = vmul.f32 %v354, %v663
    %v680 = vmul.f32 %v355, %v664
    %v681 = vmul.f32 %v356, %v665
    %v682 = vmul.f32 %v357, %v666
    %v683 = vmul.f32 %v358, %v667
    %v684 = vmul.f32 %v359, %v648
    %v685 = vmul.f32 %v360, %v649
    %v686 = vmul.f32 %v361, %v650
    %v687 = vmul.f32 %v362, %v651
    %v688 = vpack.c.bf16 %v672, %v668
    %v689 = vpack.c.bf16 %v673, %v669
    %v690 = vpack.c.bf16 %v674, %v670
    %v691 = vpack.c.bf16 %v675, %v671
    %v692 = vpack.c.bf16 %v680, %v676
    %v693 = vpack.c.bf16 %v681, %v677
    %v694 = vpack.c.bf16 %v682, %v678
    %v695 = vpack.c.bf16 %v683, %v679
    %v696 = vpack.c.bf16 %v684, %v684
    %v697 = vpack.c.bf16 %v685, %v685
    %v698 = vpack.c.bf16 %v686, %v686
    %v699 = vpack.c.bf16 %v687, %v687
    %v701 = vsel %vm390, %v60, 0
    %v704 = vsel %vm394, %v696, 0
    %v707 = vsel %vm394, %v697, 0
    %v710 = vsel %vm394, %v698, 0
    %v713 = vsel %vm394, %v699, 0
    %715 = vmatpush.bf16.msra.mxu0 0
    %716 = vmatpush.bf16.msra.mxu0 0
    %717 = vmatpush.bf16.msra.mxu0 0
    %718 = vmatpush.bf16.msra.mxu0 0
    %719 = vmatpush.bf16.msra.mxu0 0
    %720 = vmatpush.bf16.msra.mxu0 %v704
    %721 = vmatpush.bf16.msra.mxu0 %v692
    %722 = vmatpush.bf16.msra.mxu0 %v688
    %723 = vmatmul.bf16.gmra.mxu0 %v701
    %v724 = vpop.f32.mrf.mxu0
    %v725 = vadd.f32 0.0, %v724
    %v726 = vpop.f32.mrf.mxu0
    %727 = vdwg.mxu0
    %728 = vmatpush.bf16.msra.mxu0 0
    %729 = vmatpush.bf16.msra.mxu0 0
    %730 = vmatpush.bf16.msra.mxu0 0
    %731 = vmatpush.bf16.msra.mxu0 0
    %732 = vmatpush.bf16.msra.mxu0 0
    %733 = vmatpush.bf16.msra.mxu0 %v707
    %734 = vmatpush.bf16.msra.mxu0 %v693
    %735 = vmatpush.bf16.msra.mxu0 %v689
    %736 = vmatmul.bf16.gmra.mxu0 %v701
    %v737 = vpop.f32.mrf.mxu0
    %v738 = vadd.f32 0.0, %v737
    %v739 = vpop.f32.mrf.mxu0
    %740 = vdwg.mxu0
    %741 = vmatpush.bf16.msra.mxu0 0
    %742 = vmatpush.bf16.msra.mxu0 0
    %743 = vmatpush.bf16.msra.mxu0 0
    %744 = vmatpush.bf16.msra.mxu0 0
    %745 = vmatpush.bf16.msra.mxu0 0
    %746 = vmatpush.bf16.msra.mxu0 %v710
    %747 = vmatpush.bf16.msra.mxu0 %v694
    %748 = vmatpush.bf16.msra.mxu0 %v690
    %749 = vmatmul.bf16.gmra.mxu0 %v701
    %v750 = vpop.f32.mrf.mxu0
    %v751 = vadd.f32 0.0, %v750
    %v752 = vpop.f32.mrf.mxu0
    %753 = vdwg.mxu0
    %754 = vmatpush.bf16.msra.mxu0 0
    %755 = vmatpush.bf16.msra.mxu0 0
    %756 = vmatpush.bf16.msra.mxu0 0
    %757 = vmatpush.bf16.msra.mxu0 0
    %758 = vmatpush.bf16.msra.mxu0 0
    %759 = vmatpush.bf16.msra.mxu0 %v713
    %760 = vmatpush.bf16.msra.mxu0 %v695
    %761 = vmatpush.bf16.msra.mxu0 %v691
    %762 = vmatmul.bf16.gmra.mxu0 %v701
    %v763 = vpop.f32.mrf.mxu0
    %v764 = vadd.f32 0.0, %v763
    %v765 = vpop.f32.mrf.mxu0
    %766 = vdwg.mxu0
    %v767 = vmax.f32 %v725, 0.0
    %v768 = vmax.f32 %v738, 0.0
    %v769 = vmax.f32 %v751, 0.0
    %v770 = vmax.f32 %v764, 0.0
    %771 = vrot.lane.b32.xlu0 %v767, 17
    %v772 = vpop.permute.xlu0 %771
    %773 = vrot.lane.b32.xlu0 %v768, 17
    %v774 = vpop.permute.xlu0 %773
    %775 = vrot.lane.b32.xlu0 %v769, 17
    %v776 = vpop.permute.xlu0 %775
    %777 = vrot.lane.b32.xlu0 %v770, 17
    %v778 = vpop.permute.xlu0 %777
    %v779 = vsel %vm94, %v776, %v778
    %v780 = vsel %vm94, %v774, %v776
    %v781 = vsel %vm94, %v772, %v774
    %v782 = vsel %vm94, %v778, %v772
    %783 = vrot.lane.b32.xlu0 %v767, 16
    %v784 = vpop.permute.xlu0 %783
    %785 = vrot.lane.b32.xlu0 %v768, 16
    %v786 = vpop.permute.xlu0 %785
    %787 = vrot.lane.b32.xlu0 %v769, 16
    %v788 = vpop.permute.xlu0 %787
    %789 = vrot.lane.b32.xlu0 %v770, 16
    %v790 = vpop.permute.xlu0 %789
    %v791 = vsel %vm118, %v788, %v790
    %v792 = vsel %vm118, %v786, %v788
    %v793 = vsel %vm118, %v784, %v786
    %v794 = vsel %vm118, %v790, %v784
    %795 = vrot.lane.b32.xlu0 %v767, 15
    %v796 = vpop.permute.xlu0 %795
    %797 = vrot.lane.b32.xlu0 %v768, 15
    %v798 = vpop.permute.xlu0 %797
    %799 = vrot.lane.b32.xlu0 %v769, 15
    %v800 = vpop.permute.xlu0 %799
    %801 = vrot.lane.b32.xlu0 %v770, 15
    %v802 = vpop.permute.xlu0 %801
    %v803 = vsel %vm142, %v800, %v802
    %v804 = vsel %vm142, %v798, %v800
    %v805 = vsel %vm142, %v796, %v798
    %v806 = vsel %vm142, %v802, %v796
    %807 = vrot.lane.b32.xlu0 %v767, 1
    %v808 = vpop.permute.xlu0 %807
    %809 = vrot.lane.b32.xlu0 %v768, 1
    %v810 = vpop.permute.xlu0 %809
    %811 = vrot.lane.b32.xlu0 %v769, 1
    %v812 = vpop.permute.xlu0 %811
    %813 = vrot.lane.b32.xlu0 %v770, 1
    %v814 = vpop.permute.xlu0 %813
    %v815 = vsel %vm166, %v812, %v814
    %v816 = vsel %vm166, %v810, %v812
    %v817 = vsel %vm166, %v808, %v810
    %v818 = vsel %vm166, %v814, %v808
    %819 = vrot.lane.b32.xlu0 %v767, 127
    %v820 = vpop.permute.xlu0 %819
    %821 = vrot.lane.b32.xlu0 %v768, 127
    %v822 = vpop.permute.xlu0 %821
    %823 = vrot.lane.b32.xlu0 %v769, 127
    %v824 = vpop.permute.xlu0 %823
    %825 = vrot.lane.b32.xlu0 %v770, 127
    %v826 = vpop.permute.xlu0 %825
    %v827 = vsel %vm190, %v824, %v826
    %v828 = vsel %vm190, %v822, %v824
    %v829 = vsel %vm190, %v820, %v822
    %v830 = vsel %vm190, %v826, %v820
    %831 = vrot.lane.b32.xlu0 %v767, 113
    %v832 = vpop.permute.xlu0 %831
    %833 = vrot.lane.b32.xlu0 %v768, 113
    %v834 = vpop.permute.xlu0 %833
    %835 = vrot.lane.b32.xlu0 %v769, 113
    %v836 = vpop.permute.xlu0 %835
    %837 = vrot.lane.b32.xlu0 %v770, 113
    %v838 = vpop.permute.xlu0 %837
    %v839 = vsel %vm214, %v836, %v838
    %v840 = vsel %vm214, %v834, %v836
    %v841 = vsel %vm214, %v832, %v834
    %v842 = vsel %vm214, %v838, %v832
    %843 = vrot.lane.b32.xlu0 %v767, 112
    %v844 = vpop.permute.xlu0 %843
    %845 = vrot.lane.b32.xlu0 %v768, 112
    %v846 = vpop.permute.xlu0 %845
    %847 = vrot.lane.b32.xlu0 %v769, 112
    %v848 = vpop.permute.xlu0 %847
    %849 = vrot.lane.b32.xlu0 %v770, 112
    %v850 = vpop.permute.xlu0 %849
    %v851 = vsel %vm238, %v848, %v850
    %v852 = vsel %vm238, %v846, %v848
    %v853 = vsel %vm238, %v844, %v846
    %v854 = vsel %vm238, %v850, %v844
    %855 = vrot.lane.b32.xlu0 %v767, 111
    %v856 = vpop.permute.xlu0 %855
    %857 = vrot.lane.b32.xlu0 %v768, 111
    %v858 = vpop.permute.xlu0 %857
    %859 = vrot.lane.b32.xlu0 %v769, 111
    %v860 = vpop.permute.xlu0 %859
    %861 = vrot.lane.b32.xlu0 %v770, 111
    %v862 = vpop.permute.xlu0 %861
    %v863 = vsel %vm262, %v860, %v862
    %v864 = vsel %vm262, %v858, %v860
    %v865 = vsel %vm262, %v856, %v858
    %v866 = vsel %vm262, %v862, %v856
    %v871 = vrot.slane %v794, 4
    %v872 = vrot.slane %v793, 4
    %v873 = vrot.slane %v792, 4
    %v874 = vrot.slane %v791, 4
    %v883 = vrot.slane %v818, 4
    %v884 = vrot.slane %v817, 4
    %v885 = vrot.slane %v816, 4
    %v886 = vrot.slane %v815, 4
    %v895 = vrot.slane %v829, 4
    %v896 = vrot.slane %v828, 4
    %v897 = vrot.slane %v827, 4
    %v898 = vrot.slane %v830, 4
    %v907 = vrot.slane %v853, 4
    %v908 = vrot.slane %v852, 4
    %v909 = vrot.slane %v851, 4
    %v910 = vrot.slane %v854, 4
    %v915 = vsel %vm326, %v782, %v871
    %v916 = vsel %vm326, %v781, %v872
    %v917 = vsel %vm326, %v780, %v873
    %v918 = vsel %vm326, %v779, %v874
    %v919 = vsel %vm326, %v806, %v883
    %v920 = vsel %vm326, %v805, %v884
    %v921 = vsel %vm326, %v804, %v885
    %v922 = vsel %vm326, %v803, %v886
    %v923 = vsel %vm326, %v767, %v895
    %v924 = vsel %vm326, %v768, %v896
    %v925 = vsel %vm326, %v769, %v897
    %v926 = vsel %vm326, %v770, %v898
    %v927 = vsel %vm326, %v841, %v907
    %v928 = vsel %vm326, %v840, %v908
    %v929 = vsel %vm326, %v839, %v909
    %v930 = vsel %vm326, %v842, %v910
    %v931 = vmul.f32 %v915, %v37
    %v932 = vmul.f32 %v916, %v38
    %v933 = vmul.f32 %v917, %v39
    %v934 = vmul.f32 %v918, %v40
    %v935 = vmul.f32 %v919, %v41
    %v936 = vmul.f32 %v920, %v42
    %v937 = vmul.f32 %v921, %v43
    %v938 = vmul.f32 %v922, %v44
    %v939 = vmul.f32 %v923, %v45
    %v940 = vmul.f32 %v924, %v46
    %v941 = vmul.f32 %v925, %v47
    %v942 = vmul.f32 %v926, %v48
    %v943 = vmul.f32 %v927, %v49
    %v944 = vmul.f32 %v928, %v50
    %v945 = vmul.f32 %v929, %v51
    %v946 = vmul.f32 %v930, %v52
    %v947 = vmul.f32 %v865, %v53
    %v948 = vmul.f32 %v864, %v54
    %v949 = vmul.f32 %v863, %v55
    %v950 = vmul.f32 %v866, %v56
    %v951 = vpack.c.bf16 %v935, %v931
    %v952 = vpack.c.bf16 %v936, %v932
    %v953 = vpack.c.bf16 %v937, %v933
    %v954 = vpack.c.bf16 %v938, %v934
    %v955 = vpack.c.bf16 %v943, %v939
    %v956 = vpack.c.bf16 %v944, %v940
    %v957 = vpack.c.bf16 %v945, %v941
    %v958 = vpack.c.bf16 %v946, %v942
    %v959 = vpack.c.bf16 %v947, %v947
    %v960 = vpack.c.bf16 %v948, %v948
    %v961 = vpack.c.bf16 %v949, %v949
    %v962 = vpack.c.bf16 %v950, %v950
    %964 = vset.pattern.permute.xlu0 0
    %965 = vperm.xlu0 %964, %v69
    %v966 = vpop.permute.xlu0 %965
    %969 = vset.pattern.permute.xlu0 0
    %970 = vperm.xlu0 %969, %v70
    %v971 = vpop.permute.xlu0 %970
    %v975 = vunpack.c.l.b16 %v62
    %v976 = vunpack.c.l.b16 %v63
    %v977 = vpack.c.b16 %v976, %v975
    %v979 = vsel %vm390, %v977, 0
    %v982 = vsel %vm394, %v959, 0
    %v985 = vsel %vm394, %v960, 0
    %v988 = vsel %vm394, %v961, 0
    %v991 = vsel %vm394, %v962, 0
    %993 = vmatpush.bf16.msra.mxu0 0
    %994 = vmatpush.bf16.msra.mxu0 0
    %995 = vmatpush.bf16.msra.mxu0 0
    %996 = vmatpush.bf16.msra.mxu0 0
    %997 = vmatpush.bf16.msra.mxu0 0
    %998 = vmatpush.bf16.msra.mxu0 %v982
    %999 = vmatpush.bf16.msra.mxu0 %v955
    %1000 = vmatpush.bf16.msra.mxu0 %v951
    %1001 = vmatmul.bf16.gmra.mxu0 %v979
    %v1002 = vpop.f32.mrf.mxu0
    %v1003 = vadd.f32 %v966, %v1002
    %v1004 = vpop.f32.mrf.mxu0
    %v1005 = vadd.f32 %v971, %v1004
    %1006 = vdwg.mxu0
    %1007 = vmatpush.bf16.msra.mxu0 0
    %1008 = vmatpush.bf16.msra.mxu0 0
    %1009 = vmatpush.bf16.msra.mxu0 0
    %1010 = vmatpush.bf16.msra.mxu0 0
    %1011 = vmatpush.bf16.msra.mxu0 0
    %1012 = vmatpush.bf16.msra.mxu0 %v985
    %1013 = vmatpush.bf16.msra.mxu0 %v956
    %1014 = vmatpush.bf16.msra.mxu0 %v952
    %1015 = vmatmul.bf16.gmra.mxu0 %v979
    %v1016 = vpop.f32.mrf.mxu0
    %v1017 = vadd.f32 %v966, %v1016
    %v1018 = vpop.f32.mrf.mxu0
    %v1019 = vadd.f32 %v971, %v1018
    %1020 = vdwg.mxu0
    %1021 = vmatpush.bf16.msra.mxu0 0
    %1022 = vmatpush.bf16.msra.mxu0 0
    %1023 = vmatpush.bf16.msra.mxu0 0
    %1024 = vmatpush.bf16.msra.mxu0 0
    %1025 = vmatpush.bf16.msra.mxu0 0
    %1026 = vmatpush.bf16.msra.mxu0 %v988
    %1027 = vmatpush.bf16.msra.mxu0 %v957
    %1028 = vmatpush.bf16.msra.mxu0 %v953
    %1029 = vmatmul.bf16.gmra.mxu0 %v979
    %v1030 = vpop.f32.mrf.mxu0
    %v1031 = vadd.f32 %v966, %v1030
    %v1032 = vpop.f32.mrf.mxu0
    %v1033 = vadd.f32 %v971, %v1032
    %1034 = vdwg.mxu0
    %1035 = vmatpush.bf16.msra.mxu0 0
    %1036 = vmatpush.bf16.msra.mxu0 0
    %1037 = vmatpush.bf16.msra.mxu0 0
    %1038 = vmatpush.bf16.msra.mxu0 0
    %1039 = vmatpush.bf16.msra.mxu0 0
    %1040 = vmatpush.bf16.msra.mxu0 %v991
    %1041 = vmatpush.bf16.msra.mxu0 %v958
    %1042 = vmatpush.bf16.msra.mxu0 %v954
    %1043 = vmatmul.bf16.gmra.mxu0 %v979
    %v1044 = vpop.f32.mrf.mxu0
    %v1045 = vadd.f32 %v966, %v1044
    %v1046 = vpop.f32.mrf.mxu0
    %v1047 = vadd.f32 %v971, %v1046
    %1048 = vdwg.mxu0
    %v1049 = vsel %vm463, %v1005, -inf
    %v1050 = vmax.f32 %v1003, %v1049
    %v1051 = vrot.slane %v1050, 4
    %v1052 = vmax.f32 %v1050, %v1051
    %v1053 = vrot.slane %v1052, 2
    %v1054 = vmax.f32 %v1052, %v1053
    %v1055 = vrot.slane %v1054, 1
    %v1056 = vmax.f32 %v1054, %v1055
    %v1057 = vsel %vm463, %v1019, -inf
    %v1058 = vmax.f32 %v1017, %v1057
    %v1059 = vrot.slane %v1058, 4
    %v1060 = vmax.f32 %v1058, %v1059
    %v1061 = vrot.slane %v1060, 2
    %v1062 = vmax.f32 %v1060, %v1061
    %v1063 = vrot.slane %v1062, 1
    %v1064 = vmax.f32 %v1062, %v1063
    %v1065 = vsel %vm463, %v1033, -inf
    %v1066 = vmax.f32 %v1031, %v1065
    %v1067 = vrot.slane %v1066, 4
    %v1068 = vmax.f32 %v1066, %v1067
    %v1069 = vrot.slane %v1068, 2
    %v1070 = vmax.f32 %v1068, %v1069
    %v1071 = vrot.slane %v1070, 1
    %v1072 = vmax.f32 %v1070, %v1071
    %v1073 = vsel %vm463, %v1047, -inf
    %v1074 = vmax.f32 %v1045, %v1073
    %v1075 = vrot.slane %v1074, 4
    %v1076 = vmax.f32 %v1074, %v1075
    %v1077 = vrot.slane %v1076, 2
    %v1078 = vmax.f32 %v1076, %v1077
    %v1079 = vrot.slane %v1078, 1
    %v1080 = vmax.f32 %v1078, %v1079
    %v1081 = vsub.f32 %v1003, %v1056
    %v1082 = vsub.f32 %v1017, %v1064
    %v1083 = vsub.f32 %v1031, %v1072
    %v1084 = vsub.f32 %v1045, %v1080
    %v1085 = vsub.f32 %v1005, %v1056
    %v1086 = vsub.f32 %v1019, %v1064
    %v1087 = vsub.f32 %v1033, %v1072
    %v1088 = vsub.f32 %v1047, %v1080
    %v1089 = vmul.f32 %v1081, 1.442695
    %v1090 = vpow.pop %v1089
    %v1091 = vmul.f32 %v1082, 1.442695
    %v1092 = vpow.pop %v1091
    %v1093 = vmul.f32 %v1083, 1.442695
    %v1094 = vpow.pop %v1093
    %v1095 = vmul.f32 %v1084, 1.442695
    %v1096 = vpow.pop %v1095
    %v1097 = vmul.f32 %v1085, 1.442695
    %v1098 = vpow.pop %v1097
    %v1099 = vmul.f32 %v1086, 1.442695
    %v1100 = vpow.pop %v1099
    %v1101 = vmul.f32 %v1087, 1.442695
    %v1102 = vpow.pop %v1101
    %v1103 = vmul.f32 %v1088, 1.442695
    %v1104 = vpow.pop %v1103
    %v1105 = vsel %vm463, %v1098, 0.0
    %v1106 = vadd.f32 %v1090, %v1105
    %v1107 = vrot.slane %v1106, 4
    %v1108 = vadd.f32 %v1106, %v1107
    %v1109 = vrot.slane %v1108, 2
    %v1110 = vadd.f32 %v1108, %v1109
    %v1111 = vrot.slane %v1110, 1
    %v1112 = vadd.f32 %v1110, %v1111
    %v1113 = vsel %vm463, %v1100, 0.0
    %v1114 = vadd.f32 %v1092, %v1113
    %v1115 = vrot.slane %v1114, 4
    %v1116 = vadd.f32 %v1114, %v1115
    %v1117 = vrot.slane %v1116, 2
    %v1118 = vadd.f32 %v1116, %v1117
    %v1119 = vrot.slane %v1118, 1
    %v1120 = vadd.f32 %v1118, %v1119
    %v1121 = vsel %vm463, %v1102, 0.0
    %v1122 = vadd.f32 %v1094, %v1121
    %v1123 = vrot.slane %v1122, 4
    %v1124 = vadd.f32 %v1122, %v1123
    %v1125 = vrot.slane %v1124, 2
    %v1126 = vadd.f32 %v1124, %v1125
    %v1127 = vrot.slane %v1126, 1
    %v1128 = vadd.f32 %v1126, %v1127
    %v1129 = vsel %vm463, %v1104, 0.0
    %v1130 = vadd.f32 %v1096, %v1129
    %v1131 = vrot.slane %v1130, 4
    %v1132 = vadd.f32 %v1130, %v1131
    %v1133 = vrot.slane %v1132, 2
    %v1134 = vadd.f32 %v1132, %v1133
    %v1135 = vrot.slane %v1134, 1
    %v1136 = vadd.f32 %v1134, %v1135
    %v1137 = vrcp.pop %v1112
    %v1138 = vmul.f32 %v1112, %v1137
    %v1139 = vsub.f32 1.0, %v1138
    %v1140 = vmul.f32 %v1137, %v1139
    %v1141 = vadd.f32 %v1137, %v1140
    %vm1142 = vweird.f32 %v1112
    %vm1143 = vweird.f32 %v1137
    %vm1144 = vmor %vm1142, %vm1143
    %v1145 = vsel %vm1144, %v1137, %v1141
    %v1146 = vand.u32 2147483647, %v1112
    %vm1147 = vcmp.eq.f32.partialorder %v1146, 8.507059e+37
    %v1148 = vand.u32 %v1112, 2147483648
    %v1149 = vor.u32 1.1754944e-38, %v1148
    %v1150 = vsel %vm1147, %v1149, %v1145
    %v1151 = vmul.f32 %v1090, %v1150
    %v1152 = vrcp.pop %v1120
    %v1153 = vmul.f32 %v1120, %v1152
    %v1154 = vsub.f32 1.0, %v1153
    %v1155 = vmul.f32 %v1152, %v1154
    %v1156 = vadd.f32 %v1152, %v1155
    %vm1157 = vweird.f32 %v1120
    %vm1158 = vweird.f32 %v1152
    %vm1159 = vmor %vm1157, %vm1158
    %v1160 = vsel %vm1159, %v1152, %v1156
    %v1161 = vand.u32 2147483647, %v1120
    %vm1162 = vcmp.eq.f32.partialorder %v1161, 8.507059e+37
    %v1163 = vand.u32 %v1120, 2147483648
    %v1164 = vor.u32 1.1754944e-38, %v1163
    %v1165 = vsel %vm1162, %v1164, %v1160
    %v1166 = vmul.f32 %v1092, %v1165
    %v1167 = vrcp.pop %v1128
    %v1168 = vmul.f32 %v1128, %v1167
    %v1169 = vsub.f32 1.0, %v1168
    %v1170 = vmul.f32 %v1167, %v1169
    %v1171 = vadd.f32 %v1167, %v1170
    %vm1172 = vweird.f32 %v1128
    %vm1173 = vweird.f32 %v1167
    %vm1174 = vmor %vm1172, %vm1173
    %v1175 = vsel %vm1174, %v1167, %v1171
    %v1176 = vand.u32 2147483647, %v1128
    %vm1177 = vcmp.eq.f32.partialorder %v1176, 8.507059e+37
    %v1178 = vand.u32 %v1128, 2147483648
    %v1179 = vor.u32 1.1754944e-38, %v1178
    %v1180 = vsel %vm1177, %v1179, %v1175
    %v1181 = vmul.f32 %v1094, %v1180
    %v1182 = vrcp.pop %v1136
    %v1183 = vmul.f32 %v1136, %v1182
    %v1184 = vsub.f32 1.0, %v1183
    %v1185 = vmul.f32 %v1182, %v1184
    %v1186 = vadd.f32 %v1182, %v1185
    %vm1187 = vweird.f32 %v1136
    %vm1188 = vweird.f32 %v1182
    %vm1189 = vmor %vm1187, %vm1188
    %v1190 = vsel %vm1189, %v1182, %v1186
    %v1191 = vand.u32 2147483647, %v1136
    %vm1192 = vcmp.eq.f32.partialorder %v1191, 8.507059e+37
    %v1193 = vand.u32 %v1136, 2147483648
    %v1194 = vor.u32 1.1754944e-38, %v1193
    %v1195 = vsel %vm1192, %v1194, %v1190
    %v1196 = vmul.f32 %v1096, %v1195
    %v1197 = vmul.f32 %v1098, %v1150
    %v1198 = vmul.f32 %v1100, %v1165
    %v1199 = vmul.f32 %v1102, %v1180
    %v1200 = vmul.f32 %v1104, %v1195
    %v1201 = vperm.slane %v1151, 0
    %v1202 = vperm.slane %v1166, 0
    %v1203 = vperm.slane %v1181, 0
    %v1204 = vperm.slane %v1196, 0
    %v1205 = vperm.slane %v1151, 1
    %v1206 = vperm.slane %v1166, 1
    %v1207 = vperm.slane %v1181, 1
    %v1208 = vperm.slane %v1196, 1
    %v1209 = vperm.slane %v1151, 2
    %v1210 = vperm.slane %v1166, 2
    %v1211 = vperm.slane %v1181, 2
    %v1212 = vperm.slane %v1196, 2
    %v1213 = vperm.slane %v1151, 3
    %v1214 = vperm.slane %v1166, 3
    %v1215 = vperm.slane %v1181, 3
    %v1216 = vperm.slane %v1196, 3
    %v1217 = vperm.slane %v1151, 4
    %v1218 = vperm.slane %v1166, 4
    %v1219 = vperm.slane %v1181, 4
    %v1220 = vperm.slane %v1196, 4
    %v1221 = vperm.slane %v1151, 5
    %v1222 = vperm.slane %v1166, 5
    %v1223 = vperm.slane %v1181, 5
    %v1224 = vperm.slane %v1196, 5
    %v1225 = vperm.slane %v1151, 6
    %v1226 = vperm.slane %v1166, 6
    %v1227 = vperm.slane %v1181, 6
    %v1228 = vperm.slane %v1196, 6
    %v1229 = vperm.slane %v1151, 7
    %v1230 = vperm.slane %v1166, 7
    %v1231 = vperm.slane %v1181, 7
    %v1232 = vperm.slane %v1196, 7
    %v1233 = vperm.slane %v1197, 0
    %v1234 = vperm.slane %v1198, 0
    %v1235 = vperm.slane %v1199, 0
    %v1236 = vperm.slane %v1200, 0
    %v1237 = vsel %vm326, %v1201, %v1205
    %v1238 = vsel %vm326, %v1202, %v1206
    %v1239 = vsel %vm326, %v1203, %v1207
    %v1240 = vsel %vm326, %v1204, %v1208
    %v1241 = vsel %vm326, %v1209, %v1213
    %v1242 = vsel %vm326, %v1210, %v1214
    %v1243 = vsel %vm326, %v1211, %v1215
    %v1244 = vsel %vm326, %v1212, %v1216
    %v1245 = vsel %vm326, %v1217, %v1221
    %v1246 = vsel %vm326, %v1218, %v1222
    %v1247 = vsel %vm326, %v1219, %v1223
    %v1248 = vsel %vm326, %v1220, %v1224
    %v1249 = vsel %vm326, %v1225, %v1229
    %v1250 = vsel %vm326, %v1226, %v1230
    %v1251 = vsel %vm326, %v1227, %v1231
    %v1252 = vsel %vm326, %v1228, %v1232
    %v1253 = vmul.f32 %v931, %v1237
    %v1254 = vmul.f32 %v932, %v1238
    %v1255 = vmul.f32 %v933, %v1239
    %v1256 = vmul.f32 %v934, %v1240
    %v1257 = vmul.f32 %v935, %v1241
    %v1258 = vmul.f32 %v936, %v1242
    %v1259 = vmul.f32 %v937, %v1243
    %v1260 = vmul.f32 %v938, %v1244
    %v1261 = vmul.f32 %v939, %v1245
    %v1262 = vmul.f32 %v940, %v1246
    %v1263 = vmul.f32 %v941, %v1247
    %v1264 = vmul.f32 %v942, %v1248
    %v1265 = vmul.f32 %v943, %v1249
    %v1266 = vmul.f32 %v944, %v1250
    %v1267 = vmul.f32 %v945, %v1251
    %v1268 = vmul.f32 %v946, %v1252
    %v1269 = vmul.f32 %v947, %v1233
    %v1270 = vmul.f32 %v948, %v1234
    %v1271 = vmul.f32 %v949, %v1235
    %v1272 = vmul.f32 %v950, %v1236
    %v1273 = vpack.c.bf16 %v1257, %v1253
    %v1274 = vpack.c.bf16 %v1258, %v1254
    %v1275 = vpack.c.bf16 %v1259, %v1255
    %v1276 = vpack.c.bf16 %v1260, %v1256
    %v1277 = vpack.c.bf16 %v1265, %v1261
    %v1278 = vpack.c.bf16 %v1266, %v1262
    %v1279 = vpack.c.bf16 %v1267, %v1263
    %v1280 = vpack.c.bf16 %v1268, %v1264
    %v1281 = vpack.c.bf16 %v1269, %v1269
    %v1282 = vpack.c.bf16 %v1270, %v1270
    %v1283 = vpack.c.bf16 %v1271, %v1271
    %v1284 = vpack.c.bf16 %v1272, %v1272
    %v1286 = vsel %vm390, %v65, 0
    %v1289 = vsel %vm394, %v1281, 0
    %v1292 = vsel %vm394, %v1282, 0
    %v1295 = vsel %vm394, %v1283, 0
    %v1298 = vsel %vm394, %v1284, 0
    %1300 = vmatpush.bf16.msra.mxu0 0
    %1301 = vmatpush.bf16.msra.mxu0 0
    %1302 = vmatpush.bf16.msra.mxu0 0
    %1303 = vmatpush.bf16.msra.mxu0 0
    %1304 = vmatpush.bf16.msra.mxu0 0
    %1305 = vmatpush.bf16.msra.mxu0 %v1289
    %1306 = vmatpush.bf16.msra.mxu0 %v1277
    %1307 = vmatpush.bf16.msra.mxu0 %v1273
    %1308 = vmatmul.bf16.gmra.mxu0 %v1286
    %v1309 = vpop.f32.mrf.mxu0
    %v1310 = vadd.f32 0.0, %v1309
    %v1311 = vpop.f32.mrf.mxu0
    %1312 = vdwg.mxu0
    %1313 = vmatpush.bf16.msra.mxu0 0
    %1314 = vmatpush.bf16.msra.mxu0 0
    %1315 = vmatpush.bf16.msra.mxu0 0
    %1316 = vmatpush.bf16.msra.mxu0 0
    %1317 = vmatpush.bf16.msra.mxu0 0
    %1318 = vmatpush.bf16.msra.mxu0 %v1292
    %1319 = vmatpush.bf16.msra.mxu0 %v1278
    %1320 = vmatpush.bf16.msra.mxu0 %v1274
    %1321 = vmatmul.bf16.gmra.mxu0 %v1286
    %v1322 = vpop.f32.mrf.mxu0
    %v1323 = vadd.f32 0.0, %v1322
    %v1324 = vpop.f32.mrf.mxu0
    %1325 = vdwg.mxu0
    %1326 = vmatpush.bf16.msra.mxu0 0
    %1327 = vmatpush.bf16.msra.mxu0 0
    %1328 = vmatpush.bf16.msra.mxu0 0
    %1329 = vmatpush.bf16.msra.mxu0 0
    %1330 = vmatpush.bf16.msra.mxu0 0
    %1331 = vmatpush.bf16.msra.mxu0 %v1295
    %1332 = vmatpush.bf16.msra.mxu0 %v1279
    %1333 = vmatpush.bf16.msra.mxu0 %v1275
    %1334 = vmatmul.bf16.gmra.mxu0 %v1286
    %v1335 = vpop.f32.mrf.mxu0
    %v1336 = vadd.f32 0.0, %v1335
    %v1337 = vpop.f32.mrf.mxu0
    %1338 = vdwg.mxu0
    %1339 = vmatpush.bf16.msra.mxu0 0
    %1340 = vmatpush.bf16.msra.mxu0 0
    %1341 = vmatpush.bf16.msra.mxu0 0
    %1342 = vmatpush.bf16.msra.mxu0 0
    %1343 = vmatpush.bf16.msra.mxu0 0
    %1344 = vmatpush.bf16.msra.mxu0 %v1298
    %1345 = vmatpush.bf16.msra.mxu0 %v1280
    %1346 = vmatpush.bf16.msra.mxu0 %v1276
    %1347 = vmatmul.bf16.gmra.mxu0 %v1286
    %v1348 = vpop.f32.mrf.mxu0
    %v1349 = vadd.f32 0.0, %v1348
    %v1350 = vpop.f32.mrf.mxu0
    %1351 = vdwg.mxu0
    %v1356 = vrot.slane %v1323, 4
    %v1357 = vrot.slane %v1349, 4
    %v1358 = vsel %vm326, %v1310, %v1356
    %v1359 = vsel %vm326, %v1336, %v1357
    %v1362 = vadd.f32 %v35, %v1358
    %v1363 = vadd.f32 %v36, %v1359
    %1364 = vst [vmem:[#allocation5] sm:$0xff] %v1362
    %1365 = vst [vmem:[#allocation5 + $0x8] sm:$0xff] %v1363
    // Predicated region
    $region22: #{tpu_custom_call.1} parent=1 // pred_check
      _
    $region23: #{tpu_custom_call.1} parent=1 // pred_check_branch
      %1367 = sbr.rel (0) target = $region25
    $region24: #{tpu_custom_call.1} parent=1 // pred_region
      %1369 = vsyncadd [#allocation4], 0
      %s1371 = sshll.u32 [#allocation5], 4
      %s1372 = int_to_ptr.vmem [resolvable:$true] %s1371
      %s1373 = sshll.u32 %s4, 4
      %s1374 = int_to_ptr.hbm [resolvable:$true] %s1373
      %1376 = dma.vmem_to_hbm [thread:$0]  %s1372, 256, %s1374, [#allocation4]
    $region25: #{tpu_custom_call.1} parent=1 // pred_fallthru
      _
    // Predicated region
    $region26: #{tpu_custom_call.1} parent=1 // pred_check
      _
    $region27: #{tpu_custom_call.1} parent=1 // pred_check_branch
      %1378 = sbr.rel (0) target = $region29
    $region28: #{tpu_custom_call.1} parent=1 // pred_region
      %1380 = dma.done [#allocation4], 256
    $region29: #{tpu_custom_call.1} parent=1 // pred_fallthru
      _
    %1381 = vsyncpa [#allocation3], 1
    %1382 = vsyncpa [#allocation4], 1

</llo_original>
